<compile_context>
chip_gen: v6e
topology: v6e:2x2x1
jax: 0.10.0
libtpu: 0.0.40
codegen_flags: <defaults>
</compile_context>

<pallas_src>
import math
import functools

import jax
import jax.numpy as jnp
from jax import lax
from jax.experimental import pallas as pl
from jax.experimental.pallas import tpu as pltpu


def _mha_kernel(q_ref, h_ref, wq_ref, wk_ref, wv_ref, wo_ref, o_ref, *,
                norm_factor, b_tile, n_heads, key_dim, val_dim, embed_dim,
                n_query, graph_size, input_dim):
    # (B_TILE, rows, D) -> (B_TILE*rows, D) slabs (rows=8/16 are sublane
    # multiples, so the merge is layout-trivial); cast MXU operands to bf16.
    qx = q_ref[...].reshape(b_tile * n_query, input_dim).astype(jnp.bfloat16)
    hx = h_ref[...].reshape(b_tile * graph_size, input_dim).astype(jnp.bfloat16)

    # Fused head projections: ONE wide bf16 matmul per tensor for the whole
    # batch tile.  norm_factor is folded into Q here (not into compat).
    Qc = (jnp.dot(qx, wq_ref[...], preferred_element_type=jnp.float32)
          * norm_factor).astype(jnp.bfloat16)                     # (Bq, H*kd)
    Kc = jnp.dot(hx, wk_ref[...],
                 preferred_element_type=jnp.float32).astype(jnp.bfloat16)  # (Bg, H*kd)
    Vc = jnp.dot(hx, wv_ref[...],
                 preferred_element_type=jnp.float32).astype(jnp.bfloat16)  # (Bg, H*vd)

    # TODO(synk): for production n_heads, replace this statically-unrolled loop
    #             with lax.fori_loop(..., unroll=True) over pl.ds slices of
    #             VMEM refs to bound vreg live ranges (n_heads here is 4).
    # TODO(synk): for production graph_size, add a KV grid axis ("arbitrary")
    #             with online-softmax accumulation instead of a full-graph K/V
    #             block, sized against v7x's 64 MiB per-TC VMEM.
    for b in range(b_tile):
        qrows = slice(b * n_query, (b + 1) * n_query)
        hrows = slice(b * graph_size, (b + 1) * graph_size)
        acc = jnp.zeros((n_query, embed_dim), jnp.float32)
        for hd in range(n_heads):
            ks = slice(hd * key_dim, (hd + 1) * key_dim)
            vs = slice(hd * val_dim, (hd + 1) * val_dim)
            Qh = Qc[qrows, ks]          # (n_query, key_dim)  bf16
            Kh = Kc[hrows, ks]          # (graph,   key_dim)  bf16
            Vh = Vc[hrows, vs]          # (graph,   val_dim)  bf16

            # Q @ K^T without materializing a transposed K; f32 accumulation.
            compat = lax.dot_general(Qh, Kh, (((1,), (1,)), ((), ())),
                                     preferred_element_type=jnp.float32)

            # Numerically-stable softmax; statistics stay in f32.
            compat = compat - jnp.max(compat, axis=-1, keepdims=True)
            e = jnp.exp(compat)
            attn = e * pl.reciprocal(jnp.sum(e, axis=-1, keepdims=True),
                                     approx=True)

            head = jnp.dot(attn.astype(jnp.bfloat16), Vh,
                           preferred_element_type=jnp.float32)    # (nq, vd)

            # Accumulate the output projection per head using a sublane-aligned
            # row slice of the fused W_out -- no per-head VMEM scatter/scratch.
            acc = acc + jnp.dot(head.astype(jnp.bfloat16), wo_ref[vs, :],
                                preferred_element_type=jnp.float32)

        # TODO(synk): embed_dim < 128 makes this a 32-lane masked store; present
        #             a lane-dense output slab at production embed_dim.
        o_ref[b] = acc.astype(o_ref.dtype)


def _pick_batch_tile(batch, rows_per_batch, target_rows=256):
    """Largest divisor of batch whose fused row-count stays <= target_rows,
    preferring an even grid length so both v7x TensorCores get work."""
    divisors = [d for d in range(1, batch + 1) if batch % d == 0]
    fit = [d for d in divisors if d * rows_per_batch <= target_rows] or [1]
    even_grid = [d for d in fit if (batch // d) % 2 == 0]
    return max(even_grid) if even_grid else max(fit)


def multi_head_attention(q, h, W_query, W_key, W_val, W_out):
    """Pallas implementation of MultiHeadAttention.forward (mask=None path)."""
    if h is None:
        h = q
    batch, n_query, input_dim = q.shape
    _, graph_size, _ = h.shape
    n_heads, _, key_dim = W_query.shape
    val_dim = W_val.shape[-1]
    embed_dim = W_out.shape[-1]
    norm_factor = 1.0 / math.sqrt(key_dim)

    # Wrapper-side head fusion + bf16 cast (pure layout plumbing).
    # wq_cat[:, h*kd + j] == W_query[h, :, j]  (head-major along lanes).
    wq_cat = jnp.transpose(W_query, (1, 0, 2)).reshape(
        input_dim, n_heads * key_dim).astype(jnp.bfloat16)
    wk_cat = jnp.transpose(W_key, (1, 0, 2)).reshape(
        input_dim, n_heads * key_dim).astype(jnp.bfloat16)
    wv_cat = jnp.transpose(W_val, (1, 0, 2)).reshape(
        input_dim, n_heads * val_dim).astype(jnp.bfloat16)
    # Matches torch's W_out.view(-1, embed_dim) (rows are head-major).
    wo_cat = W_out.reshape(n_heads * val_dim, embed_dim).astype(jnp.bfloat16)

    b_tile = _pick_batch_tile(batch, max(n_query, graph_size))
    grid = (batch // b_tile,)

    kernel = functools.partial(
        _mha_kernel, norm_factor=norm_factor, b_tile=b_tile, n_heads=n_heads,
        key_dim=key_dim, val_dim=val_dim, embed_dim=embed_dim,
        n_query=n_query, graph_size=graph_size, input_dim=input_dim)

    flops = 2 * batch * (
        n_query * input_dim * n_heads * key_dim                    # Q proj
        + graph_size * input_dim * n_heads * (key_dim + val_dim)   # K, V proj
        + n_heads * n_query * graph_size * (key_dim + val_dim)     # QK^T, attn@V
        + n_query * n_heads * val_dim * embed_dim)                 # out proj
    transcendentals = batch * n_heads * n_query * graph_size       # softmax exp
    bytes_accessed = (4 * (q.size + h.size + batch * n_query * embed_dim)
                      + 2 * (wq_cat.size + wk_cat.size + wv_cat.size
                             + wo_cat.size))

    # Explicit scoped-VMEM budget: double-buffered f32 I/O blocks + bf16
    # weights + generous headroom for in-kernel intermediates; capped at
    # 48 MiB so it also fits under v7x's 64 MiB per-TC physical VMEM.
    io_block_bytes = 4 * b_tile * (
        n_query * input_dim + graph_size * input_dim + n_query * embed_dim)
    weight_bytes = 2 * (wq_cat.size + wk_cat.size + wv_cat.size + wo_cat.size)
    interm_bytes = 4 * (
        b_tile * n_query * n_heads * key_dim
        + b_tile * graph_size * n_heads * (key_dim + val_dim)
        + n_query * graph_size + n_query * embed_dim)
    vmem_est = 2 * io_block_bytes + 2 * weight_bytes + 4 * interm_bytes
    vmem_limit = int(min(max(2 * vmem_est, 32 * 1024 * 1024), 48 * 1024 * 1024))

    # TODO(synk): mark the four constant-index weight specs with
    #             pipeline_mode=pl.Buffered(1) to reclaim their second pipeline
    #             buffer once weights are production-sized (skipped at toy
    #             scale to keep lowering maximally conservative).
    out = pl.pallas_call(
        kernel,
        out_shape=jax.ShapeDtypeStruct((batch, n_query, embed_dim), q.dtype),
        grid_spec=pltpu.PrefetchScalarGridSpec(
            num_scalar_prefetch=0,
            grid=grid,
            in_specs=[
                pl.BlockSpec((b_tile, n_query, input_dim), lambda b: (b, 0, 0)),
                pl.BlockSpec((b_tile, graph_size, input_dim), lambda b: (b, 0, 0)),
                pl.BlockSpec((input_dim, n_heads * key_dim), lambda b: (0, 0)),
                pl.BlockSpec((input_dim, n_heads * key_dim), lambda b: (0, 0)),
                pl.BlockSpec((input_dim, n_heads * val_dim), lambda b: (0, 0)),
                pl.BlockSpec((n_heads * val_dim, embed_dim), lambda b: (0, 0)),
            ],
            out_specs=pl.BlockSpec((b_tile, n_query, embed_dim),
                                   lambda b: (b, 0, 0)),
        ),
        compiler_params=pltpu.CompilerParams(
            dimension_semantics=("parallel",),
            vmem_limit_bytes=vmem_limit,
        ),
        cost_estimate=pl.CostEstimate(
            flops=flops,
            transcendentals=transcendentals,
            bytes_accessed=bytes_accessed),
    )(q, h, wq_cat, wk_cat, wv_cat, wo_cat)
    return out


def _reference(q, h, W_query, W_key, W_val, W_out):
    """Plain-JAX (f32) transcription of the PyTorch forward (mask=None)."""
    if h is None:
        h = q
    n_heads, input_dim, key_dim = W_query.shape
    val_dim = W_val.shape[-1]
    embed_dim = W_out.shape[-1]
    batch, n_query, _ = q.shape
    graph = h.shape[1]
    norm = 1.0 / math.sqrt(key_dim)

    qflat = q.reshape(-1, input_dim)
    hflat = h.reshape(-1, input_dim)
    Q = jnp.matmul(qflat, W_query).reshape(n_heads, batch, n_query, key_dim)
    K = jnp.matmul(hflat, W_key).reshape(n_heads, batch, graph, key_dim)
    V = jnp.matmul(hflat, W_val).reshape(n_heads, batch, graph, val_dim)
    compat = norm * jnp.matmul(Q, jnp.swapaxes(K, 2, 3))
    attn = jax.nn.softmax(compat, axis=-1)
    heads = jnp.matmul(attn, V)
    out = jnp.matmul(
        jnp.transpose(heads, (1, 2, 0, 3)).reshape(-1, n_heads * val_dim),
        W_out.reshape(-1, embed_dim),
    ).reshape(batch, n_query, embed_dim)
    return out


if __name__ == "__main__":
    # Small, forward-consistent shapes (cross-attention path, mask=None).
    n_heads, input_dim, embed_dim = 4, 32, 32
    key_dim = embed_dim // n_heads   # 8
    val_dim = key_dim                # 8
    batch, n_query, graph_size = 4, 8, 16

    key = jax.random.PRNGKey(0)
    kq, kh, k1, k2, k3, k4 = jax.random.split(key, 6)

    q = jax.random.normal(kq, (batch, n_query, input_dim), dtype=jnp.float32)
    h = jax.random.normal(kh, (batch, graph_size, input_dim), dtype=jnp.float32)

    def uniform_init(k, shape):
        stdv = 1.0 / math.sqrt(shape[-1])
        return jax.random.uniform(k, shape, jnp.float32, minval=-stdv, maxval=stdv)

    W_query = uniform_init(k1, (n_heads, input_dim, key_dim))
    W_key = uniform_init(k2, (n_heads, input_dim, key_dim))
    W_val = uniform_init(k3, (n_heads, input_dim, val_dim))
    W_out = uniform_init(k4, (n_heads, val_dim, embed_dim))

    out = multi_head_attention(q, h, W_query, W_key, W_val, W_out)
    out = jax.block_until_ready(out)

    ref = _reference(q, h, W_query, W_key, W_val, W_out)
    assert out.shape == (batch, n_query, embed_dim)
    # Tolerance covers bf16 MXU operands + approximate (EUP) softmax reciprocal.
    err = float(jnp.max(jnp.abs(out - ref)))
    assert jnp.allclose(out, ref, atol=5e-2, rtol=5e-2), err

    print("KERNEL_OK")
</pallas_src>

<mosaic_0001>
module attributes {stable_mosaic.version = 11 : i64} {
  func.func @_mha_kernel(%arg0: i32, %arg1: memref<2x8x32xf32, #tpu.memory_space<vmem>>, %arg2: memref<2x16x32xf32, #tpu.memory_space<vmem>>, %arg3: memref<32x32xbf16, #tpu.memory_space<vmem>>, %arg4: memref<32x32xbf16, #tpu.memory_space<vmem>>, %arg5: memref<32x32xbf16, #tpu.memory_space<vmem>>, %arg6: memref<32x32xbf16, #tpu.memory_space<vmem>>, %arg7: memref<2x8x32xf32, #tpu.memory_space<vmem>>) attributes {dimension_semantics = [#tpu.dimension_semantics<parallel>], iteration_bounds = array<i64: 2>, scalar_prefetch = 0 : i64, scratch_operands = 0 : i64, tpu.core_type = #tpu.core_type<tc>, window_params = [{transform_indices = @transform_0, window_bounds = array<i64: 2, 8, 32>}, {transform_indices = @transform_1, window_bounds = array<i64: 2, 16, 32>}, {pipeline_mode = #tpu.pipeline_mode<synchronous>, transform_indices = @transform_2, window_bounds = array<i64: 32, 32>}, {pipeline_mode = #tpu.pipeline_mode<synchronous>, transform_indices = @transform_3, window_bounds = array<i64: 32, 32>}, {pipeline_mode = #tpu.pipeline_mode<synchronous>, transform_indices = @transform_4, window_bounds = array<i64: 32, 32>}, {pipeline_mode = #tpu.pipeline_mode<synchronous>, transform_indices = @transform_5, window_bounds = array<i64: 32, 32>}, {transform_indices = @transform_6, window_bounds = array<i64: 2, 8, 32>}]} {
    %c0 = arith.constant 0 : index
    %c0_0 = arith.constant 0 : index
    %c0_1 = arith.constant 0 : index
    %0 = vector.load %arg1[%c0, %c0_0, %c0_1] : memref<2x8x32xf32, #tpu.memory_space<vmem>>, vector<2x8x32xf32>
    %1 = vector.shape_cast %0 : vector<2x8x32xf32> to vector<16x32xf32>
    %2 = arith.truncf %1 : vector<16x32xf32> to vector<16x32xbf16>
    %c0_2 = arith.constant 0 : index
    %c0_3 = arith.constant 0 : index
    %c0_4 = arith.constant 0 : index
    %3 = vector.load %arg2[%c0_2, %c0_3, %c0_4] : memref<2x16x32xf32, #tpu.memory_space<vmem>>, vector<2x16x32xf32>
    %4 = vector.shape_cast %3 : vector<2x16x32xf32> to vector<32x32xf32>
    %5 = arith.truncf %4 : vector<32x32xf32> to vector<32x32xbf16>
    %c0_5 = arith.constant 0 : index
    %c0_6 = arith.constant 0 : index
    %6 = vector.load %arg3[%c0_5, %c0_6] : memref<32x32xbf16, #tpu.memory_space<vmem>>, vector<32x32xbf16>
    %cst = arith.constant dense<0.000000e+00> : vector<16x32xf32>
    %7 = tpu.matmul %2, %6, %cst {dimension_numbers = #tpu.dot_dimension_numbers<[1], [0], [0], [1], [0, 0, 1, 1], [], []>} : vector<16x32xbf16>, vector<32x32xbf16>, vector<16x32xf32> -> vector<16x32xf32>
    %cst_7 = arith.constant 0.353553385 : f32
    %8 = vector.broadcast %cst_7 : f32 to vector<16x32xf32>
    %9 = arith.mulf %7, %8 : vector<16x32xf32>
    %10 = arith.truncf %9 : vector<16x32xf32> to vector<16x32xbf16>
    %c0_8 = arith.constant 0 : index
    %c0_9 = arith.constant 0 : index
    %11 = vector.load %arg4[%c0_8, %c0_9] : memref<32x32xbf16, #tpu.memory_space<vmem>>, vector<32x32xbf16>
    %cst_10 = arith.constant dense<0.000000e+00> : vector<32x32xf32>
    %12 = tpu.matmul %5, %11, %cst_10 {dimension_numbers = #tpu.dot_dimension_numbers<[1], [0], [0], [1], [0, 0, 1, 1], [], []>} : vector<32x32xbf16>, vector<32x32xbf16>, vector<32x32xf32> -> vector<32x32xf32>
    %13 = arith.truncf %12 : vector<32x32xf32> to vector<32x32xbf16>
    %c0_11 = arith.constant 0 : index
    %c0_12 = arith.constant 0 : index
    %14 = vector.load %arg5[%c0_11, %c0_12] : memref<32x32xbf16, #tpu.memory_space<vmem>>, vector<32x32xbf16>
    %cst_13 = arith.constant dense<0.000000e+00> : vector<32x32xf32>
    %15 = tpu.matmul %5, %14, %cst_13 {dimension_numbers = #tpu.dot_dimension_numbers<[1], [0], [0], [1], [0, 0, 1, 1], [], []>} : vector<32x32xbf16>, vector<32x32xbf16>, vector<32x32xf32> -> vector<32x32xf32>
    %16 = arith.truncf %15 : vector<32x32xf32> to vector<32x32xbf16>
    %cst_14 = arith.constant 0.000000e+00 : f32
    %17 = vector.broadcast %cst_14 : f32 to vector<8x32xf32>
    %18 = vector.extract_strided_slice %10 {offsets = [0, 0], sizes = [8, 8], strides = [1, 1]} : vector<16x32xbf16> to vector<8x8xbf16>
    %19 = vector.extract_strided_slice %13 {offsets = [0, 0], sizes = [16, 8], strides = [1, 1]} : vector<32x32xbf16> to vector<16x8xbf16>
    %20 = vector.extract_strided_slice %16 {offsets = [0, 0], sizes = [16, 8], strides = [1, 1]} : vector<32x32xbf16> to vector<16x8xbf16>
    %cst_15 = arith.constant dense<0.000000e+00> : vector<8x16xf32>
    %21 = tpu.matmul %18, %19, %cst_15 {dimension_numbers = #tpu.dot_dimension_numbers<[1], [1], [0], [0], [0, 0, 1, 0], [], []>} : vector<8x8xbf16>, vector<16x8xbf16>, vector<8x16xf32> -> vector<8x16xf32>
    %cst_16 = arith.constant dense<0xFF800000> : vector<8xf32>
    %22 = vector.multi_reduction <maximumf>, %21, %cst_16 [1] : vector<8x16xf32> to vector<8xf32>
    %23 = vector.shape_cast %22 : vector<8xf32> to vector<8x1xf32>
    %24 = vector.broadcast %23 : vector<8x1xf32> to vector<8x16xf32>
    %25 = arith.subf %21, %24 : vector<8x16xf32>
    %26 = math.exp %25 : vector<8x16xf32>
    %cst_17 = arith.constant dense<0.000000e+00> : vector<8xf32>
    %27 = vector.multi_reduction <add>, %26, %cst_17 [1] : vector<8x16xf32> to vector<8xf32>
    %28 = vector.shape_cast %27 : vector<8xf32> to vector<8x1xf32>
    %29 = tpu.reciprocal %28 {approx = true} : vector<8x1xf32> -> vector<8x1xf32>
    %30 = vector.broadcast %29 : vector<8x1xf32> to vector<8x16xf32>
    %31 = arith.mulf %26, %30 : vector<8x16xf32>
    %32 = arith.truncf %31 : vector<8x16xf32> to vector<8x16xbf16>
    %cst_18 = arith.constant dense<0.000000e+00> : vector<8x8xf32>
    %33 = tpu.matmul %32, %20, %cst_18 {dimension_numbers = #tpu.dot_dimension_numbers<[1], [0], [0], [1], [0, 0, 1, 1], [], []>} : vector<8x16xbf16>, vector<16x8xbf16>, vector<8x8xf32> -> vector<8x8xf32>
    %34 = arith.truncf %33 : vector<8x8xf32> to vector<8x8xbf16>
    %c0_19 = arith.constant 0 : index
    %c0_20 = arith.constant 0 : index
    %35 = vector.load %arg6[%c0_19, %c0_20] : memref<32x32xbf16, #tpu.memory_space<vmem>>, vector<8x32xbf16>
    %cst_21 = arith.constant dense<0.000000e+00> : vector<8x32xf32>
    %36 = tpu.matmul %34, %35, %cst_21 {dimension_numbers = #tpu.dot_dimension_numbers<[1], [0], [0], [1], [0, 0, 1, 1], [], []>} : vector<8x8xbf16>, vector<8x32xbf16>, vector<8x32xf32> -> vector<8x32xf32>
    %37 = arith.addf %17, %36 : vector<8x32xf32>
    %38 = vector.extract_strided_slice %10 {offsets = [0, 8], sizes = [8, 8], strides = [1, 1]} : vector<16x32xbf16> to vector<8x8xbf16>
    %39 = vector.extract_strided_slice %13 {offsets = [0, 8], sizes = [16, 8], strides = [1, 1]} : vector<32x32xbf16> to vector<16x8xbf16>
    %40 = vector.extract_strided_slice %16 {offsets = [0, 8], sizes = [16, 8], strides = [1, 1]} : vector<32x32xbf16> to vector<16x8xbf16>
    %cst_22 = arith.constant dense<0.000000e+00> : vector<8x16xf32>
    %41 = tpu.matmul %38, %39, %cst_22 {dimension_numbers = #tpu.dot_dimension_numbers<[1], [1], [0], [0], [0, 0, 1, 0], [], []>} : vector<8x8xbf16>, vector<16x8xbf16>, vector<8x16xf32> -> vector<8x16xf32>
    %cst_23 = arith.constant dense<0xFF800000> : vector<8xf32>
    %42 = vector.multi_reduction <maximumf>, %41, %cst_23 [1] : vector<8x16xf32> to vector<8xf32>
    %43 = vector.shape_cast %42 : vector<8xf32> to vector<8x1xf32>
    %44 = vector.broadcast %43 : vector<8x1xf32> to vector<8x16xf32>
    %45 = arith.subf %41, %44 : vector<8x16xf32>
    %46 = math.exp %45 : vector<8x16xf32>
    %cst_24 = arith.constant dense<0.000000e+00> : vector<8xf32>
    %47 = vector.multi_reduction <add>, %46, %cst_24 [1] : vector<8x16xf32> to vector<8xf32>
    %48 = vector.shape_cast %47 : vector<8xf32> to vector<8x1xf32>
    %49 = tpu.reciprocal %48 {approx = true} : vector<8x1xf32> -> vector<8x1xf32>
    %50 = vector.broadcast %49 : vector<8x1xf32> to vector<8x16xf32>
    %51 = arith.mulf %46, %50 : vector<8x16xf32>
    %52 = arith.truncf %51 : vector<8x16xf32> to vector<8x16xbf16>
    %cst_25 = arith.constant dense<0.000000e+00> : vector<8x8xf32>
    %53 = tpu.matmul %52, %40, %cst_25 {dimension_numbers = #tpu.dot_dimension_numbers<[1], [0], [0], [1], [0, 0, 1, 1], [], []>} : vector<8x16xbf16>, vector<16x8xbf16>, vector<8x8xf32> -> vector<8x8xf32>
    %54 = arith.truncf %53 : vector<8x8xf32> to vector<8x8xbf16>
    %c8 = arith.constant 8 : index
    %c0_26 = arith.constant 0 : index
    %55 = vector.load %arg6[%c8, %c0_26] : memref<32x32xbf16, #tpu.memory_space<vmem>>, vector<8x32xbf16>
    %cst_27 = arith.constant dense<0.000000e+00> : vector<8x32xf32>
    %56 = tpu.matmul %54, %55, %cst_27 {dimension_numbers = #tpu.dot_dimension_numbers<[1], [0], [0], [1], [0, 0, 1, 1], [], []>} : vector<8x8xbf16>, vector<8x32xbf16>, vector<8x32xf32> -> vector<8x32xf32>
    %57 = arith.addf %37, %56 : vector<8x32xf32>
    %58 = vector.extract_strided_slice %10 {offsets = [0, 16], sizes = [8, 8], strides = [1, 1]} : vector<16x32xbf16> to vector<8x8xbf16>
    %59 = vector.extract_strided_slice %13 {offsets = [0, 16], sizes = [16, 8], strides = [1, 1]} : vector<32x32xbf16> to vector<16x8xbf16>
    %60 = vector.extract_strided_slice %16 {offsets = [0, 16], sizes = [16, 8], strides = [1, 1]} : vector<32x32xbf16> to vector<16x8xbf16>
    %cst_28 = arith.constant dense<0.000000e+00> : vector<8x16xf32>
    %61 = tpu.matmul %58, %59, %cst_28 {dimension_numbers = #tpu.dot_dimension_numbers<[1], [1], [0], [0], [0, 0, 1, 0], [], []>} : vector<8x8xbf16>, vector<16x8xbf16>, vector<8x16xf32> -> vector<8x16xf32>
    %cst_29 = arith.constant dense<0xFF800000> : vector<8xf32>
    %62 = vector.multi_reduction <maximumf>, %61, %cst_29 [1] : vector<8x16xf32> to vector<8xf32>
    %63 = vector.shape_cast %62 : vector<8xf32> to vector<8x1xf32>
    %64 = vector.broadcast %63 : vector<8x1xf32> to vector<8x16xf32>
    %65 = arith.subf %61, %64 : vector<8x16xf32>
    %66 = math.exp %65 : vector<8x16xf32>
    %cst_30 = arith.constant dense<0.000000e+00> : vector<8xf32>
    %67 = vector.multi_reduction <add>, %66, %cst_30 [1] : vector<8x16xf32> to vector<8xf32>
    %68 = vector.shape_cast %67 : vector<8xf32> to vector<8x1xf32>
    %69 = tpu.reciprocal %68 {approx = true} : vector<8x1xf32> -> vector<8x1xf32>
    %70 = vector.broadcast %69 : vector<8x1xf32> to vector<8x16xf32>
    %71 = arith.mulf %66, %70 : vector<8x16xf32>
    %72 = arith.truncf %71 : vector<8x16xf32> to vector<8x16xbf16>
    %cst_31 = arith.constant dense<0.000000e+00> : vector<8x8xf32>
    %73 = tpu.matmul %72, %60, %cst_31 {dimension_numbers = #tpu.dot_dimension_numbers<[1], [0], [0], [1], [0, 0, 1, 1], [], []>} : vector<8x16xbf16>, vector<16x8xbf16>, vector<8x8xf32> -> vector<8x8xf32>
    %74 = arith.truncf %73 : vector<8x8xf32> to vector<8x8xbf16>
    %c16 = arith.constant 16 : index
    %c0_32 = arith.constant 0 : index
    %75 = vector.load %arg6[%c16, %c0_32] : memref<32x32xbf16, #tpu.memory_space<vmem>>, vector<8x32xbf16>
    %cst_33 = arith.constant dense<0.000000e+00> : vector<8x32xf32>
    %76 = tpu.matmul %74, %75, %cst_33 {dimension_numbers = #tpu.dot_dimension_numbers<[1], [0], [0], [1], [0, 0, 1, 1], [], []>} : vector<8x8xbf16>, vector<8x32xbf16>, vector<8x32xf32> -> vector<8x32xf32>
    %77 = arith.addf %57, %76 : vector<8x32xf32>
    %78 = vector.extract_strided_slice %10 {offsets = [0, 24], sizes = [8, 8], strides = [1, 1]} : vector<16x32xbf16> to vector<8x8xbf16>
    %79 = vector.extract_strided_slice %13 {offsets = [0, 24], sizes = [16, 8], strides = [1, 1]} : vector<32x32xbf16> to vector<16x8xbf16>
    %80 = vector.extract_strided_slice %16 {offsets = [0, 24], sizes = [16, 8], strides = [1, 1]} : vector<32x32xbf16> to vector<16x8xbf16>
    %cst_34 = arith.constant dense<0.000000e+00> : vector<8x16xf32>
    %81 = tpu.matmul %78, %79, %cst_34 {dimension_numbers = #tpu.dot_dimension_numbers<[1], [1], [0], [0], [0, 0, 1, 0], [], []>} : vector<8x8xbf16>, vector<16x8xbf16>, vector<8x16xf32> -> vector<8x16xf32>
    %cst_35 = arith.constant dense<0xFF800000> : vector<8xf32>
    %82 = vector.multi_reduction <maximumf>, %81, %cst_35 [1] : vector<8x16xf32> to vector<8xf32>
    %83 = vector.shape_cast %82 : vector<8xf32> to vector<8x1xf32>
    %84 = vector.broadcast %83 : vector<8x1xf32> to vector<8x16xf32>
    %85 = arith.subf %81, %84 : vector<8x16xf32>
    %86 = math.exp %85 : vector<8x16xf32>
    %cst_36 = arith.constant dense<0.000000e+00> : vector<8xf32>
    %87 = vector.multi_reduction <add>, %86, %cst_36 [1] : vector<8x16xf32> to vector<8xf32>
    %88 = vector.shape_cast %87 : vector<8xf32> to vector<8x1xf32>
    %89 = tpu.reciprocal %88 {approx = true} : vector<8x1xf32> -> vector<8x1xf32>
    %90 = vector.broadcast %89 : vector<8x1xf32> to vector<8x16xf32>
    %91 = arith.mulf %86, %90 : vector<8x16xf32>
    %92 = arith.truncf %91 : vector<8x16xf32> to vector<8x16xbf16>
    %cst_37 = arith.constant dense<0.000000e+00> : vector<8x8xf32>
    %93 = tpu.matmul %92, %80, %cst_37 {dimension_numbers = #tpu.dot_dimension_numbers<[1], [0], [0], [1], [0, 0, 1, 1], [], []>} : vector<8x16xbf16>, vector<16x8xbf16>, vector<8x8xf32> -> vector<8x8xf32>
    %94 = arith.truncf %93 : vector<8x8xf32> to vector<8x8xbf16>
    %c24 = arith.constant 24 : index
    %c0_38 = arith.constant 0 : index
    %95 = vector.load %arg6[%c24, %c0_38] : memref<32x32xbf16, #tpu.memory_space<vmem>>, vector<8x32xbf16>
    %cst_39 = arith.constant dense<0.000000e+00> : vector<8x32xf32>
    %96 = tpu.matmul %94, %95, %cst_39 {dimension_numbers = #tpu.dot_dimension_numbers<[1], [0], [0], [1], [0, 0, 1, 1], [], []>} : vector<8x8xbf16>, vector<8x32xbf16>, vector<8x32xf32> -> vector<8x32xf32>
    %97 = arith.addf %77, %96 : vector<8x32xf32>
    %c0_40 = arith.constant 0 : index
    %c0_41 = arith.constant 0 : index
    %c0_42 = arith.constant 0 : index
    %98 = vector.load %arg7[%c0_40, %c0_41, %c0_42] : memref<2x8x32xf32, #tpu.memory_space<vmem>>, vector<1x8x32xf32>
    %99 = vector.shape_cast %98 : vector<1x8x32xf32> to vector<8x32xf32>
    %100 = vector.shape_cast %97 : vector<8x32xf32> to vector<1x8x32xf32>
    tpu.vector_store %arg7[%c0_40, %c0_41, %c0_42], %100 {strides = array<i32>} : memref<2x8x32xf32, #tpu.memory_space<vmem>>, vector<1x8x32xf32>,
    %cst_43 = arith.constant 0.000000e+00 : f32
    %101 = vector.broadcast %cst_43 : f32 to vector<8x32xf32>
    %102 = vector.extract_strided_slice %10 {offsets = [8, 0], sizes = [8, 8], strides = [1, 1]} : vector<16x32xbf16> to vector<8x8xbf16>
    %103 = vector.extract_strided_slice %13 {offsets = [16, 0], sizes = [16, 8], strides = [1, 1]} : vector<32x32xbf16> to vector<16x8xbf16>
    %104 = vector.extract_strided_slice %16 {offsets = [16, 0], sizes = [16, 8], strides = [1, 1]} : vector<32x32xbf16> to vector<16x8xbf16>
    %cst_44 = arith.constant dense<0.000000e+00> : vector<8x16xf32>
    %105 = tpu.matmul %102, %103, %cst_44 {dimension_numbers = #tpu.dot_dimension_numbers<[1], [1], [0], [0], [0, 0, 1, 0], [], []>} : vector<8x8xbf16>, vector<16x8xbf16>, vector<8x16xf32> -> vector<8x16xf32>
    %cst_45 = arith.constant dense<0xFF800000> : vector<8xf32>
    %106 = vector.multi_reduction <maximumf>, %105, %cst_45 [1] : vector<8x16xf32> to vector<8xf32>
    %107 = vector.shape_cast %106 : vector<8xf32> to vector<8x1xf32>
    %108 = vector.broadcast %107 : vector<8x1xf32> to vector<8x16xf32>
    %109 = arith.subf %105, %108 : vector<8x16xf32>
    %110 = math.exp %109 : vector<8x16xf32>
    %cst_46 = arith.constant dense<0.000000e+00> : vector<8xf32>
    %111 = vector.multi_reduction <add>, %110, %cst_46 [1] : vector<8x16xf32> to vector<8xf32>
    %112 = vector.shape_cast %111 : vector<8xf32> to vector<8x1xf32>
    %113 = tpu.reciprocal %112 {approx = true} : vector<8x1xf32> -> vector<8x1xf32>
    %114 = vector.broadcast %113 : vector<8x1xf32> to vector<8x16xf32>
    %115 = arith.mulf %110, %114 : vector<8x16xf32>
    %116 = arith.truncf %115 : vector<8x16xf32> to vector<8x16xbf16>
    %cst_47 = arith.constant dense<0.000000e+00> : vector<8x8xf32>
    %117 = tpu.matmul %116, %104, %cst_47 {dimension_numbers = #tpu.dot_dimension_numbers<[1], [0], [0], [1], [0, 0, 1, 1], [], []>} : vector<8x16xbf16>, vector<16x8xbf16>, vector<8x8xf32> -> vector<8x8xf32>
    %118 = arith.truncf %117 : vector<8x8xf32> to vector<8x8xbf16>
    %c0_48 = arith.constant 0 : index
    %c0_49 = arith.constant 0 : index
    %119 = vector.load %arg6[%c0_48, %c0_49] : memref<32x32xbf16, #tpu.memory_space<vmem>>, vector<8x32xbf16>
    %cst_50 = arith.constant dense<0.000000e+00> : vector<8x32xf32>
    %120 = tpu.matmul %118, %119, %cst_50 {dimension_numbers = #tpu.dot_dimension_numbers<[1], [0], [0], [1], [0, 0, 1, 1], [], []>} : vector<8x8xbf16>, vector<8x32xbf16>, vector<8x32xf32> -> vector<8x32xf32>
    %121 = arith.addf %101, %120 : vector<8x32xf32>
    %122 = vector.extract_strided_slice %10 {offsets = [8, 8], sizes = [8, 8], strides = [1, 1]} : vector<16x32xbf16> to vector<8x8xbf16>
    %123 = vector.extract_strided_slice %13 {offsets = [16, 8], sizes = [16, 8], strides = [1, 1]} : vector<32x32xbf16> to vector<16x8xbf16>
    %124 = vector.extract_strided_slice %16 {offsets = [16, 8], sizes = [16, 8], strides = [1, 1]} : vector<32x32xbf16> to vector<16x8xbf16>
    %cst_51 = arith.constant dense<0.000000e+00> : vector<8x16xf32>
    %125 = tpu.matmul %122, %123, %cst_51 {dimension_numbers = #tpu.dot_dimension_numbers<[1], [1], [0], [0], [0, 0, 1, 0], [], []>} : vector<8x8xbf16>, vector<16x8xbf16>, vector<8x16xf32> -> vector<8x16xf32>
    %cst_52 = arith.constant dense<0xFF800000> : vector<8xf32>
    %126 = vector.multi_reduction <maximumf>, %125, %cst_52 [1] : vector<8x16xf32> to vector<8xf32>
    %127 = vector.shape_cast %126 : vector<8xf32> to vector<8x1xf32>
    %128 = vector.broadcast %127 : vector<8x1xf32> to vector<8x16xf32>
    %129 = arith.subf %125, %128 : vector<8x16xf32>
    %130 = math.exp %129 : vector<8x16xf32>
    %cst_53 = arith.constant dense<0.000000e+00> : vector<8xf32>
    %131 = vector.multi_reduction <add>, %130, %cst_53 [1] : vector<8x16xf32> to vector<8xf32>
    %132 = vector.shape_cast %131 : vector<8xf32> to vector<8x1xf32>
    %133 = tpu.reciprocal %132 {approx = true} : vector<8x1xf32> -> vector<8x1xf32>
    %134 = vector.broadcast %133 : vector<8x1xf32> to vector<8x16xf32>
    %135 = arith.mulf %130, %134 : vector<8x16xf32>
    %136 = arith.truncf %135 : vector<8x16xf32> to vector<8x16xbf16>
    %cst_54 = arith.constant dense<0.000000e+00> : vector<8x8xf32>
    %137 = tpu.matmul %136, %124, %cst_54 {dimension_numbers = #tpu.dot_dimension_numbers<[1], [0], [0], [1], [0, 0, 1, 1], [], []>} : vector<8x16xbf16>, vector<16x8xbf16>, vector<8x8xf32> -> vector<8x8xf32>
    %138 = arith.truncf %137 : vector<8x8xf32> to vector<8x8xbf16>
    %c8_55 = arith.constant 8 : index
    %c0_56 = arith.constant 0 : index
    %139 = vector.load %arg6[%c8_55, %c0_56] : memref<32x32xbf16, #tpu.memory_space<vmem>>, vector<8x32xbf16>
    %cst_57 = arith.constant dense<0.000000e+00> : vector<8x32xf32>
    %140 = tpu.matmul %138, %139, %cst_57 {dimension_numbers = #tpu.dot_dimension_numbers<[1], [0], [0], [1], [0, 0, 1, 1], [], []>} : vector<8x8xbf16>, vector<8x32xbf16>, vector<8x32xf32> -> vector<8x32xf32>
    %141 = arith.addf %121, %140 : vector<8x32xf32>
    %142 = vector.extract_strided_slice %10 {offsets = [8, 16], sizes = [8, 8], strides = [1, 1]} : vector<16x32xbf16> to vector<8x8xbf16>
    %143 = vector.extract_strided_slice %13 {offsets = [16, 16], sizes = [16, 8], strides = [1, 1]} : vector<32x32xbf16> to vector<16x8xbf16>
    %144 = vector.extract_strided_slice %16 {offsets = [16, 16], sizes = [16, 8], strides = [1, 1]} : vector<32x32xbf16> to vector<16x8xbf16>
    %cst_58 = arith.constant dense<0.000000e+00> : vector<8x16xf32>
    %145 = tpu.matmul %142, %143, %cst_58 {dimension_numbers = #tpu.dot_dimension_numbers<[1], [1], [0], [0], [0, 0, 1, 0], [], []>} : vector<8x8xbf16>, vector<16x8xbf16>, vector<8x16xf32> -> vector<8x16xf32>
    %cst_59 = arith.constant dense<0xFF800000> : vector<8xf32>
    %146 = vector.multi_reduction <maximumf>, %145, %cst_59 [1] : vector<8x16xf32> to vector<8xf32>
    %147 = vector.shape_cast %146 : vector<8xf32> to vector<8x1xf32>
    %148 = vector.broadcast %147 : vector<8x1xf32> to vector<8x16xf32>
    %149 = arith.subf %145, %148 : vector<8x16xf32>
    %150 = math.exp %149 : vector<8x16xf32>
    %cst_60 = arith.constant dense<0.000000e+00> : vector<8xf32>
    %151 = vector.multi_reduction <add>, %150, %cst_60 [1] : vector<8x16xf32> to vector<8xf32>
    %152 = vector.shape_cast %151 : vector<8xf32> to vector<8x1xf32>
    %153 = tpu.reciprocal %152 {approx = true} : vector<8x1xf32> -> vector<8x1xf32>
    %154 = vector.broadcast %153 : vector<8x1xf32> to vector<8x16xf32>
    %155 = arith.mulf %150, %154 : vector<8x16xf32>
    %156 = arith.truncf %155 : vector<8x16xf32> to vector<8x16xbf16>
    %cst_61 = arith.constant dense<0.000000e+00> : vector<8x8xf32>
    %157 = tpu.matmul %156, %144, %cst_61 {dimension_numbers = #tpu.dot_dimension_numbers<[1], [0], [0], [1], [0, 0, 1, 1], [], []>} : vector<8x16xbf16>, vector<16x8xbf16>, vector<8x8xf32> -> vector<8x8xf32>
    %158 = arith.truncf %157 : vector<8x8xf32> to vector<8x8xbf16>
    %c16_62 = arith.constant 16 : index
    %c0_63 = arith.constant 0 : index
    %159 = vector.load %arg6[%c16_62, %c0_63] : memref<32x32xbf16, #tpu.memory_space<vmem>>, vector<8x32xbf16>
    %cst_64 = arith.constant dense<0.000000e+00> : vector<8x32xf32>
    %160 = tpu.matmul %158, %159, %cst_64 {dimension_numbers = #tpu.dot_dimension_numbers<[1], [0], [0], [1], [0, 0, 1, 1], [], []>} : vector<8x8xbf16>, vector<8x32xbf16>, vector<8x32xf32> -> vector<8x32xf32>
    %161 = arith.addf %141, %160 : vector<8x32xf32>
    %162 = vector.extract_strided_slice %10 {offsets = [8, 24], sizes = [8, 8], strides = [1, 1]} : vector<16x32xbf16> to vector<8x8xbf16>
    %163 = vector.extract_strided_slice %13 {offsets = [16, 24], sizes = [16, 8], strides = [1, 1]} : vector<32x32xbf16> to vector<16x8xbf16>
    %164 = vector.extract_strided_slice %16 {offsets = [16, 24], sizes = [16, 8], strides = [1, 1]} : vector<32x32xbf16> to vector<16x8xbf16>
    %cst_65 = arith.constant dense<0.000000e+00> : vector<8x16xf32>
    %165 = tpu.matmul %162, %163, %cst_65 {dimension_numbers = #tpu.dot_dimension_numbers<[1], [1], [0], [0], [0, 0, 1, 0], [], []>} : vector<8x8xbf16>, vector<16x8xbf16>, vector<8x16xf32> -> vector<8x16xf32>
    %cst_66 = arith.constant dense<0xFF800000> : vector<8xf32>
    %166 = vector.multi_reduction <maximumf>, %165, %cst_66 [1] : vector<8x16xf32> to vector<8xf32>
    %167 = vector.shape_cast %166 : vector<8xf32> to vector<8x1xf32>
    %168 = vector.broadcast %167 : vector<8x1xf32> to vector<8x16xf32>
    %169 = arith.subf %165, %168 : vector<8x16xf32>
    %170 = math.exp %169 : vector<8x16xf32>
    %cst_67 = arith.constant dense<0.000000e+00> : vector<8xf32>
    %171 = vector.multi_reduction <add>, %170, %cst_67 [1] : vector<8x16xf32> to vector<8xf32>
    %172 = vector.shape_cast %171 : vector<8xf32> to vector<8x1xf32>
    %173 = tpu.reciprocal %172 {approx = true} : vector<8x1xf32> -> vector<8x1xf32>
    %174 = vector.broadcast %173 : vector<8x1xf32> to vector<8x16xf32>
    %175 = arith.mulf %170, %174 : vector<8x16xf32>
    %176 = arith.truncf %175 : vector<8x16xf32> to vector<8x16xbf16>
    %cst_68 = arith.constant dense<0.000000e+00> : vector<8x8xf32>
    %177 = tpu.matmul %176, %164, %cst_68 {dimension_numbers = #tpu.dot_dimension_numbers<[1], [0], [0], [1], [0, 0, 1, 1], [], []>} : vector<8x16xbf16>, vector<16x8xbf16>, vector<8x8xf32> -> vector<8x8xf32>
    %178 = arith.truncf %177 : vector<8x8xf32> to vector<8x8xbf16>
    %c24_69 = arith.constant 24 : index
    %c0_70 = arith.constant 0 : index
    %179 = vector.load %arg6[%c24_69, %c0_70] : memref<32x32xbf16, #tpu.memory_space<vmem>>, vector<8x32xbf16>
    %cst_71 = arith.constant dense<0.000000e+00> : vector<8x32xf32>
    %180 = tpu.matmul %178, %179, %cst_71 {dimension_numbers = #tpu.dot_dimension_numbers<[1], [0], [0], [1], [0, 0, 1, 1], [], []>} : vector<8x8xbf16>, vector<8x32xbf16>, vector<8x32xf32> -> vector<8x32xf32>
    %181 = arith.addf %161, %180 : vector<8x32xf32>
    %c1 = arith.constant 1 : index
    %c0_72 = arith.constant 0 : index
    %c0_73 = arith.constant 0 : index
    %182 = vector.load %arg7[%c1, %c0_72, %c0_73] : memref<2x8x32xf32, #tpu.memory_space<vmem>>, vector<1x8x32xf32>
    %183 = vector.shape_cast %182 : vector<1x8x32xf32> to vector<8x32xf32>
    %184 = vector.shape_cast %181 : vector<8x32xf32> to vector<1x8x32xf32>
    tpu.vector_store %arg7[%c1, %c0_72, %c0_73], %184 {strides = array<i32>} : memref<2x8x32xf32, #tpu.memory_space<vmem>>, vector<1x8x32xf32>,
    return
  }
  func.func @transform_0(%arg0: i32) -> (i32, i32, i32) {
    %c0_i32 = arith.constant 0 : i32
    %c0_i32_0 = arith.constant 0 : i32
    %c0_i32_1 = arith.constant 0 : i32
    return %arg0, %c0_i32, %c0_i32_0 : i32, i32, i32
  }
  func.func @transform_1(%arg0: i32) -> (i32, i32, i32) {
    %c0_i32 = arith.constant 0 : i32
    %c0_i32_0 = arith.constant 0 : i32
    %c0_i32_1 = arith.constant 0 : i32
    return %arg0, %c0_i32, %c0_i32_0 : i32, i32, i32
  }
  func.func @transform_2(%arg0: i32) -> (i32, i32) {
    %c0_i32 = arith.constant 0 : i32
    %c0_i32_0 = arith.constant 0 : i32
    %c0_i32_1 = arith.constant 0 : i32
    return %c0_i32, %c0_i32_0 : i32, i32
  }
  func.func @transform_3(%arg0: i32) -> (i32, i32) {
    %c0_i32 = arith.constant 0 : i32
    %c0_i32_0 = arith.constant 0 : i32
    %c0_i32_1 = arith.constant 0 : i32
    return %c0_i32, %c0_i32_0 : i32, i32
  }
  func.func @transform_4(%arg0: i32) -> (i32, i32) {
    %c0_i32 = arith.constant 0 : i32
    %c0_i32_0 = arith.constant 0 : i32
    %c0_i32_1 = arith.constant 0 : i32
    return %c0_i32, %c0_i32_0 : i32, i32
  }
  func.func @transform_5(%arg0: i32) -> (i32, i32) {
    %c0_i32 = arith.constant 0 : i32
    %c0_i32_0 = arith.constant 0 : i32
    %c0_i32_1 = arith.constant 0 : i32
    return %c0_i32, %c0_i32_0 : i32, i32
  }
  func.func @transform_6(%arg0: i32) -> (i32, i32, i32) {
    %c0_i32 = arith.constant 0 : i32
    %c0_i32_0 = arith.constant 0 : i32
    %c0_i32_1 = arith.constant 0 : i32
    return %arg0, %c0_i32, %c0_i32_0 : i32, i32, i32
  }
}

</mosaic_0001>

<llo_original>
// kernel: tpu_custom_call.1
$region0: #{tpu_custom_call.1}
  #allocation0 [shape = 'u32[]', space=smem, size = 0x4, offset = 0x4, fixed_abs, tag = 'smem constant byte address 0x4 - core index']
  #allocation1 [shape = 'u32[144,128]{1,0:T(1,128)}', space=vmem, size = 0x12000, scoped, tag = 'internal scratch']
  %s0 = inlined_call_operand.hbm [shape: f32[4,8,32], index: 0, kind: input, shape index: {}]
  %s1 = inlined_call_operand.hbm [shape: f32[4,16,32], index: 1, kind: input, shape index: {}]
  %s2 = inlined_call_operand.hbm [shape: bf16[32,32], index: 2, kind: input, shape index: {}]
  %s3 = inlined_call_operand.hbm [shape: bf16[32,32], index: 3, kind: input, shape index: {}]
  %s4 = inlined_call_operand.hbm [shape: bf16[32,32], index: 4, kind: input, shape index: {}]
  %s5 = inlined_call_operand.hbm [shape: bf16[32,32], index: 5, kind: input, shape index: {}]
  %s6 = inlined_call_operand.hbm [shape: f32[4,8,32], index: 6, kind: output, shape index: {}]
  %s7 = sld [smem:[#allocation0]]
  $region81: #{tpu_custom_call.1} parent=0
    _
  %s9 = ssub.s32 1, %s7
  %s10 = scalar_select 0, %s9, %s7
  $region1: #{tpu_custom_call.1} parent=0
    #allocation2 [shape = 'u8[16384]{0}', space=vmem, size = 0x4000, scoped, tag = 'input window, operand 0']
    #allocation3 [shape = 's32[2]{0}', space=sflag, size = 0x8, scoped, tag = 'scoped memory for tpu_custom_call.1']
    #allocation4 [shape = 's32[2]{0}', space=sflag, size = 0x8, scoped, tag = 'scoped memory for tpu_custom_call.1']
    #allocation5 [shape = 'u8[32768]{0}', space=vmem, size = 0x8000, scoped, tag = 'input window, operand 1']
    #allocation6 [shape = 's32[2]{0}', space=sflag, size = 0x8, scoped, tag = 'scoped memory for tpu_custom_call.1']
    #allocation7 [shape = 'u8[8192]{0}', space=vmem, size = 0x2000, scoped, tag = 'input window, operand 2, single buffered']
    #allocation8 [shape = 'u8[8192]{0}', space=vmem, size = 0x2000, scoped, tag = 'input window, operand 3, single buffered']
    #allocation9 [shape = 's32[1]{0}', space=sflag, size = 0x4, scoped, tag = 'scoped memory for tpu_custom_call.1']
    #allocation10 [shape = 'u8[8192]{0}', space=vmem, size = 0x2000, scoped, tag = 'input window, operand 4, single buffered']
    #allocation11 [shape = 'u8[8192]{0}', space=vmem, size = 0x2000, scoped, tag = 'input window, operand 5, single buffered']
    #allocation12 [shape = 's32[1]{0}', space=sflag, size = 0x4, scoped, tag = 'scoped memory for tpu_custom_call.1']
    #allocation13 [shape = 'u8[16384]{0}', space=vmem, size = 0x4000, scoped, tag = 'output window, operand 0']
    %11 = vsyncpa [#allocation3], 0
    %s12 = scalar_lea.sflag [#allocation3], 1
    %13 = vsyncpa %s12, 0
    %14 = vsyncpa [#allocation6], 0
    %s15 = scalar_lea.sflag [#allocation6], 1
    %16 = vsyncpa %s15, 0
    %17 = vsyncpa [#allocation9], 0
    %18 = vsyncpa [#allocation12], 0
    %19 = vsyncpa [#allocation4], 0
    %s20 = scalar_lea.sflag [#allocation4], 1
    %21 = vsyncpa %s20, 0
    loop: start=0, step=1, limit=4
    $region2: #{tpu_custom_call.1} parent=1 // loop_pre_header
      _
    $region3: #{tpu_custom_call.1} parent=1 // loop_header
      %s23 = sphi 0, %s27
      %p24 = scmp.ge.s32.totalorder %s23, 4
      %s33 = sphi 0, %s35
      %s36 = sphi 0, %s33
      %s37 = sphi 0, %s36
      %s53 = sphi 0, %s37
      %s59 = sphi 0, %s61
      %s62 = sphi 0, %s59
      %s63 = sphi 0, %s62
      %s79 = sphi 0, %s63
      %s83 = sphi 0, %s83
      %s85 = sphi 0, %s83
      %s86 = sphi 0, %s85
      %s100 = sphi 0, %s86
      %s104 = sphi 0, %s104
      %s106 = sphi 0, %s104
      %s107 = sphi 0, %s106
      %s121 = sphi 0, %s107
      %s125 = sphi 0, %s125
      %s127 = sphi 0, %s125
      %s128 = sphi 0, %s127
      %s142 = sphi 0, %s128
      %s146 = sphi 0, %s146
      %s148 = sphi 0, %s146
      %s149 = sphi 0, %s148
      %s163 = sphi 0, %s149
      %s169 = sphi 0, %s171
      %s172 = sphi 0, %s169
      %s173 = sphi 0, %s172
      %s189 = sphi 0, %s173
    $region4: #{tpu_custom_call.1} parent=1 // loop_header_branch
      %26 = sbr.rel (%p24) target = $region8
    $region5: #{tpu_custom_call.1} parent=1 // loop_body
      %s28 = ssub.s32 %s23, 1
      %s29 = ssub.s32 %s23, 2
      %s30 = sadd.s32 %s23, 1
      %s31 = ssub.s32 %s23, %s30
      %p32 = scmp.eq.s32.totalorder %s31, 0
      %s34 = sadd.s32 %s33, 1
      %s35 = scalar_select %p32, %s33, %s34
      %p38 = pneg %p32
      %p39 = scmp.eq.s32.totalorder %s23, 1
      %p40 = por %p38, %p39
      %p41 = scmp.ne.s32.totalorder %s33, %s36
      %p42 = scmp.eq.s32.totalorder %s23, 0
      %p43 = por %p41, %p42
      %p44 = scmp.ne.s32.totalorder %s33, %s36
      %p45 = scmp.eq.s32.totalorder %s28, 1
      %p46 = por %p44, %p45
      %p47 = scmp.ne.s32.totalorder %s36, %s37
      %p48 = scmp.eq.s32.totalorder %s28, 0
      %p49 = por %p47, %p48
      %p50 = scmp.ne.s32.totalorder %s36, %s37
      %p51 = scmp.eq.s32.totalorder %s29, 1
      %p52 = por %p50, %p51
      %p54 = scmp.ne.s32.totalorder %s37, %s53
      %p55 = scmp.eq.s32.totalorder %s29, 0
      %p56 = por %p54, %p55
      %s57 = ssub.s32 %s23, %s30
      %p58 = scmp.eq.s32.totalorder %s57, 0
      %s60 = sadd.s32 %s59, 1
      %s61 = scalar_select %p58, %s59, %s60
      %p64 = pneg %p58
      %p65 = scmp.eq.s32.totalorder %s23, 1
      %p66 = por %p64, %p65
      %p67 = scmp.ne.s32.totalorder %s59, %s62
      %p68 = scmp.eq.s32.totalorder %s23, 0
      %p69 = por %p67, %p68
      %p70 = scmp.ne.s32.totalorder %s59, %s62
      %p71 = scmp.eq.s32.totalorder %s28, 1
      %p72 = por %p70, %p71
      %p73 = scmp.ne.s32.totalorder %s62, %s63
      %p74 = scmp.eq.s32.totalorder %s28, 0
      %p75 = por %p73, %p74
      %p76 = scmp.ne.s32.totalorder %s62, %s63
      %p77 = scmp.eq.s32.totalorder %s29, 1
      %p78 = por %p76, %p77
      %p80 = scmp.ne.s32.totalorder %s63, %s79
      %p81 = scmp.eq.s32.totalorder %s29, 0
      %p82 = por %p80, %p81
      %s84 = sadd.s32 %s83, 1
      %p87 = scmp.eq.s32.totalorder %s23, 1
      %p88 = scmp.ne.s32.totalorder %s83, %s85
      %p89 = scmp.eq.s32.totalorder %s23, 0
      %p90 = por %p88, %p89
      %p91 = scmp.ne.s32.totalorder %s83, %s85
      %p92 = scmp.eq.s32.totalorder %s28, 1
      %p93 = por %p91, %p92
      %p94 = scmp.ne.s32.totalorder %s85, %s86
      %p95 = scmp.eq.s32.totalorder %s28, 0
      %p96 = por %p94, %p95
      %p97 = scmp.ne.s32.totalorder %s85, %s86
      %p98 = scmp.eq.s32.totalorder %s29, 1
      %p99 = por %p97, %p98
      %p101 = scmp.ne.s32.totalorder %s86, %s100
      %p102 = scmp.eq.s32.totalorder %s29, 0
      %p103 = por %p101, %p102
      %s105 = sadd.s32 %s104, 1
      %p108 = scmp.eq.s32.totalorder %s23, 1
      %p109 = scmp.ne.s32.totalorder %s104, %s106
      %p110 = scmp.eq.s32.totalorder %s23, 0
      %p111 = por %p109, %p110
      %p112 = scmp.ne.s32.totalorder %s104, %s106
      %p113 = scmp.eq.s32.totalorder %s28, 1
      %p114 = por %p112, %p113
      %p115 = scmp.ne.s32.totalorder %s106, %s107
      %p116 = scmp.eq.s32.totalorder %s28, 0
      %p117 = por %p115, %p116
      %p118 = scmp.ne.s32.totalorder %s106, %s107
      %p119 = scmp.eq.s32.totalorder %s29, 1
      %p120 = por %p118, %p119
      %p122 = scmp.ne.s32.totalorder %s107, %s121
      %p123 = scmp.eq.s32.totalorder %s29, 0
      %p124 = por %p122, %p123
      %s126 = sadd.s32 %s125, 1
      %p129 = scmp.eq.s32.totalorder %s23, 1
      %p130 = scmp.ne.s32.totalorder %s125, %s127
      %p131 = scmp.eq.s32.totalorder %s23, 0
      %p132 = por %p130, %p131
      %p133 = scmp.ne.s32.totalorder %s125, %s127
      %p134 = scmp.eq.s32.totalorder %s28, 1
      %p135 = por %p133, %p134
      %p136 = scmp.ne.s32.totalorder %s127, %s128
      %p137 = scmp.eq.s32.totalorder %s28, 0
      %p138 = por %p136, %p137
      %p139 = scmp.ne.s32.totalorder %s127, %s128
      %p140 = scmp.eq.s32.totalorder %s29, 1
      %p141 = por %p139, %p140
      %p143 = scmp.ne.s32.totalorder %s128, %s142
      %p144 = scmp.eq.s32.totalorder %s29, 0
      %p145 = por %p143, %p144
      %s147 = sadd.s32 %s146, 1
      %p150 = scmp.eq.s32.totalorder %s23, 1
      %p151 = scmp.ne.s32.totalorder %s146, %s148
      %p152 = scmp.eq.s32.totalorder %s23, 0
      %p153 = por %p151, %p152
      %p154 = scmp.ne.s32.totalorder %s146, %s148
      %p155 = scmp.eq.s32.totalorder %s28, 1
      %p156 = por %p154, %p155
      %p157 = scmp.ne.s32.totalorder %s148, %s149
      %p158 = scmp.eq.s32.totalorder %s28, 0
      %p159 = por %p157, %p158
      %p160 = scmp.ne.s32.totalorder %s148, %s149
      %p161 = scmp.eq.s32.totalorder %s29, 1
      %p162 = por %p160, %p161
      %p164 = scmp.ne.s32.totalorder %s149, %s163
      %p165 = scmp.eq.s32.totalorder %s29, 0
      %p166 = por %p164, %p165
      %s167 = ssub.s32 %s23, %s30
      %p168 = scmp.eq.s32.totalorder %s167, 0
      %s170 = sadd.s32 %s169, 1
      %s171 = scalar_select %p168, %s169, %s170
      %p174 = pneg %p168
      %p175 = scmp.eq.s32.totalorder %s23, 1
      %p176 = por %p174, %p175
      %p177 = scmp.ne.s32.totalorder %s169, %s172
      %p178 = scmp.eq.s32.totalorder %s23, 0
      %p179 = por %p177, %p178
      %p180 = scmp.ne.s32.totalorder %s169, %s172
      %p181 = scmp.eq.s32.totalorder %s28, 1
      %p182 = por %p180, %p181
      %p183 = scmp.ne.s32.totalorder %s172, %s173
      %p184 = scmp.eq.s32.totalorder %s28, 0
      %p185 = por %p183, %p184
      %p186 = scmp.ne.s32.totalorder %s172, %s173
      %p187 = scmp.eq.s32.totalorder %s29, 1
      %p188 = por %p186, %p187
      %p190 = scmp.ne.s32.totalorder %s173, %s189
      %p191 = scmp.eq.s32.totalorder %s29, 0
      %p192 = por %p190, %p191
      %p193 = scmp.le.s32.totalorder 1, %s23
      %p194 = scmp.lt.s32.totalorder %s23, 3
      %p195 = pnand %p193, %p194
      %p196 = pneg %p195
      // Predicated region
      $region9: #{tpu_custom_call.1} parent=5 // pred_check
        _
      $region10: #{tpu_custom_call.1} parent=5 // pred_check_branch
        %198 = sbr.rel (%p195) target = $region12
      $region11: #{tpu_custom_call.1} parent=5 // pred_region
        %s199 = ssub.s32 %s23, 1
        // Predicated region
        $region13: #{tpu_custom_call.1} parent=11 // pred_check
          %p200 = pneg %p96
        $region14: #{tpu_custom_call.1} parent=11 // pred_check_branch
          %202 = sbr.rel (%p200) target = $region16
        $region15: #{tpu_custom_call.1} parent=11 // pred_region
          %s204 = ssub.s32 256, 256
          %205 = vsyncadd [#allocation6], %s204
          %s206 = sshll.u32 [#allocation7], 4
          %s207 = int_to_ptr.vmem [resolvable:$true] %s206
          %212 = dma.hbm_to_vmem [thread:$0]  %s2, 256, %s207, [#allocation6], 64, 64, 4
        $region16: #{tpu_custom_call.1} parent=11 // pred_fallthru
          _
        // Predicated region
        $region17: #{tpu_custom_call.1} parent=11 // pred_check
          %p213 = pneg %p117
        $region18: #{tpu_custom_call.1} parent=11 // pred_check_branch
          %215 = sbr.rel (%p213) target = $region20
        $region19: #{tpu_custom_call.1} parent=11 // pred_region
          %s217 = ssub.s32 256, 256
          %218 = vsyncadd [#allocation9], %s217
          %s219 = sshll.u32 [#allocation8], 4
          %s220 = int_to_ptr.vmem [resolvable:$true] %s219
          %225 = dma.hbm_to_vmem [thread:$0]  %s3, 256, %s220, [#allocation9], 64, 64, 4
        $region20: #{tpu_custom_call.1} parent=11 // pred_fallthru
          _
        // Predicated region
        $region21: #{tpu_custom_call.1} parent=11 // pred_check
          %p226 = pneg %p138
        $region22: #{tpu_custom_call.1} parent=11 // pred_check_branch
          %228 = sbr.rel (%p226) target = $region24
        $region23: #{tpu_custom_call.1} parent=11 // pred_region
          %s230 = ssub.s32 256, 256
          %231 = vsyncadd [#allocation9], %s230
          %s232 = sshll.u32 [#allocation10], 4
          %s233 = int_to_ptr.vmem [resolvable:$true] %s232
          %238 = dma.hbm_to_vmem [thread:$0]  %s4, 256, %s233, [#allocation9], 64, 64, 4
        $region24: #{tpu_custom_call.1} parent=11 // pred_fallthru
          _
        // Predicated region
        $region25: #{tpu_custom_call.1} parent=11 // pred_check
          %p239 = pneg %p159
        $region26: #{tpu_custom_call.1} parent=11 // pred_check_branch
          %241 = sbr.rel (%p239) target = $region28
        $region27: #{tpu_custom_call.1} parent=11 // pred_region
          %s243 = ssub.s32 256, 256
          %244 = vsyncadd [#allocation12], %s243
          %s245 = sshll.u32 [#allocation11], 4
          %s246 = int_to_ptr.vmem [resolvable:$true] %s245
          %251 = dma.hbm_to_vmem [thread:$0]  %s5, 256, %s246, [#allocation12], 64, 64, 4
        $region28: #{tpu_custom_call.1} parent=11 // pred_fallthru
          _
      $region12: #{tpu_custom_call.1} parent=5 // pred_fallthru
        _
      %p252 = scmp.lt.s32.totalorder %s23, 2
      // Predicated region
      $region29: #{tpu_custom_call.1} parent=5 // pred_check
        %p253 = pneg %p252
      $region30: #{tpu_custom_call.1} parent=5 // pred_check_branch
        %255 = sbr.rel (%p253) target = $region32
      $region31: #{tpu_custom_call.1} parent=5 // pred_region
        // Predicated region
        $region33: #{tpu_custom_call.1} parent=31 // pred_check
          %p256 = pneg %p43
        $region34: #{tpu_custom_call.1} parent=31 // pred_check_branch
          %258 = sbr.rel (%p256) target = $region36
        $region35: #{tpu_custom_call.1} parent=31 // pred_region
          %s259 = sand.u32 %s33, 1
          %s260 = scalar_lea.sflag [#allocation3], %s259
          %s261 = sand.u32 %s33, 1
          %s262 = smul.addr %s261, 16
          %s263 = scalar_lea.vmem [#allocation2], %s262
          %s264 = smul.u32 2, %s23
          %s266 = ssub.s32 256, 256
          %267 = vsyncadd %s260, %s266
          %s268 = smul.addr %s264, 128
          %s269 = scalar_lea.hbm %s0, %s268
          %s270 = sshll.u32 %s263, 4
          %s271 = int_to_ptr.vmem [resolvable:$true] %s270
          %276 = dma.hbm_to_vmem [thread:$0]  %s269, 256, %s271, %s260, 128, 128, 8
        $region36: #{tpu_custom_call.1} parent=31 // pred_fallthru
          _
        // Predicated region
        $region37: #{tpu_custom_call.1} parent=31 // pred_check
          %p277 = pneg %p69
        $region38: #{tpu_custom_call.1} parent=31 // pred_check_branch
          %279 = sbr.rel (%p277) target = $region40
        $region39: #{tpu_custom_call.1} parent=31 // pred_region
          %s280 = sand.u32 %s23, 1
          %s281 = scalar_lea.sflag [#allocation6], %s280
          %s282 = sand.u32 %s59, 1
          %s283 = smul.addr %s282, 32
          %s284 = scalar_lea.vmem [#allocation5], %s283
          %s285 = smul.u32 2, %s23
          %s287 = ssub.s32 512, 512
          %288 = vsyncadd %s281, %s287
          %s289 = smul.addr %s285, 2
          %s290 = smul.addr %s289, 128
          %s291 = scalar_lea.hbm %s1, %s290
          %s292 = sshll.u32 %s284, 4
          %s293 = int_to_ptr.vmem [resolvable:$true] %s292
          %298 = dma.hbm_to_vmem [thread:$0]  %s291, 512, %s293, %s281, 128, 128, 8
        $region40: #{tpu_custom_call.1} parent=31 // pred_fallthru
          _
      $region32: #{tpu_custom_call.1} parent=5 // pred_fallthru
        _
      %p299 = scmp.le.s32.totalorder 1, %s23
      %p300 = scmp.lt.s32.totalorder %s23, 3
      %p301 = pnand %p299, %p300
      %p302 = pneg %p301
      // Predicated region
      $region41: #{tpu_custom_call.1} parent=5 // pred_check
        _
      $region42: #{tpu_custom_call.1} parent=5 // pred_check_branch
        %304 = sbr.rel (%p301) target = $region44
      $region43: #{tpu_custom_call.1} parent=5 // pred_region
        %s305 = ssub.s32 %s23, 1
        %s306 = sand.u32 %s36, 1
        %s307 = scalar_lea.sflag [#allocation3], %s306
        %s308 = sand.u32 %s36, 1
        %s309 = smul.addr %s308, 16
        %s310 = scalar_lea.vmem [#allocation2], %s309
        // Predicated region
        $region45: #{tpu_custom_call.1} parent=43 // pred_check
          %p311 = pneg %p49
        $region46: #{tpu_custom_call.1} parent=43 // pred_check_branch
          %313 = sbr.rel (%p311) target = $region48
        $region47: #{tpu_custom_call.1} parent=43 // pred_region
          %314 = dma.done %s307, 256
        $region48: #{tpu_custom_call.1} parent=43 // pred_fallthru
          _
        %s315 = sand.u32 %s28, 1
        %s316 = scalar_lea.sflag [#allocation6], %s315
        %s317 = sand.u32 %s62, 1
        %s318 = smul.addr %s317, 32
        %s319 = scalar_lea.vmem [#allocation5], %s318
        // Predicated region
        $region49: #{tpu_custom_call.1} parent=43 // pred_check
          %p320 = pneg %p75
        $region50: #{tpu_custom_call.1} parent=43 // pred_check_branch
          %322 = sbr.rel (%p320) target = $region52
        $region51: #{tpu_custom_call.1} parent=43 // pred_region
          %323 = dma.done %s316, 512
        $region52: #{tpu_custom_call.1} parent=43 // pred_fallthru
          _
        // Predicated region
        $region53: #{tpu_custom_call.1} parent=43 // pred_check
          %p324 = pneg %p96
        $region54: #{tpu_custom_call.1} parent=43 // pred_check_branch
          %326 = sbr.rel (%p324) target = $region56
        $region55: #{tpu_custom_call.1} parent=43 // pred_region
          %327 = dma.done [#allocation6], 256
        $region56: #{tpu_custom_call.1} parent=43 // pred_fallthru
          _
        // Predicated region
        $region57: #{tpu_custom_call.1} parent=43 // pred_check
          %p328 = pneg %p117
        $region58: #{tpu_custom_call.1} parent=43 // pred_check_branch
          %330 = sbr.rel (%p328) target = $region60
        $region59: #{tpu_custom_call.1} parent=43 // pred_region
          %331 = dma.done [#allocation9], 256
        $region60: #{tpu_custom_call.1} parent=43 // pred_fallthru
          _
        // Predicated region
        $region61: #{tpu_custom_call.1} parent=43 // pred_check
          %p332 = pneg %p138
        $region62: #{tpu_custom_call.1} parent=43 // pred_check_branch
          %334 = sbr.rel (%p332) target = $region64
        $region63: #{tpu_custom_call.1} parent=43 // pred_region
          %335 = dma.done [#allocation9], 256
        $region64: #{tpu_custom_call.1} parent=43 // pred_fallthru
          _
        // Predicated region
        $region65: #{tpu_custom_call.1} parent=43 // pred_check
          %p336 = pneg %p159
        $region66: #{tpu_custom_call.1} parent=43 // pred_check_branch
          %338 = sbr.rel (%p336) target = $region68
        $region67: #{tpu_custom_call.1} parent=43 // pred_region
          %339 = dma.done [#allocation12], 256
        $region68: #{tpu_custom_call.1} parent=43 // pred_fallthru
          _
        %s340 = sand.u32 %s36, 1
        %s341 = scalar_lea.sflag [#allocation3], %s340
        %s342 = sand.u32 %s36, 1
        %s343 = smul.addr %s342, 16
        %s344 = scalar_lea.vmem [#allocation2], %s343
        %p345 = pneg %p49
        %p346 = pneg %p46
        %s347 = sand.u32 %s28, 1
        %s348 = scalar_lea.sflag [#allocation6], %s347
        %s349 = sand.u32 %s62, 1
        %s350 = smul.addr %s349, 32
        %s351 = scalar_lea.vmem [#allocation5], %s350
        %p352 = pneg %p75
        %p353 = pneg %p72
        %p354 = pneg %p96
        %p355 = pneg %p93
        %p356 = pneg %p117
        %p357 = pneg %p114
        %p358 = pneg %p138
        %p359 = pneg %p135
        %p360 = pneg %p159
        %p361 = pneg %p156
        %p362 = pneg %p185
        %p363 = pneg %p182
        %s364 = sand.u32 %s172, 1
        %s365 = scalar_lea.sflag [#allocation4], %s364
        %s366 = sand.u32 %s172, 1
        %s367 = smul.addr %s366, 16
        %s368 = scalar_lea.vmem [#allocation13], %s367
        %s369 = smul.u32 2, %s28
        %s370 = smul.u32 2, %s28
        %s371 = smul.u32 2, %s28
        %v373 = vld [vmem:[%s310] sm:$0xff]
        %v374 = vld [vmem:[%s310 + $0x8] sm:$0xff]
        %v375 = vpack.c.bf16 %v374, %v373
        %v376 = vld [vmem:[%s319] sm:$0xff]
        %v377 = vld [vmem:[%s319 + $0x8] sm:$0xff]
        %v378 = vld [vmem:[%s319 + $0x10] sm:$0xff]
        %v379 = vld [vmem:[%s319 + $0x18] sm:$0xff]
        %v380 = vpack.c.bf16 %v377, %v376
        %v381 = vpack.c.bf16 %v379, %v378
        %v382 = vld [vmem:[#allocation7] sm:$0xf]
        %v383 = vld [vmem:[#allocation7 + $0x4] sm:$0xf]
        %v384 = vld [vmem:[#allocation7 + $0x8] sm:$0xf]
        %v385 = vld [vmem:[#allocation7 + $0xc] sm:$0xf]
        %v390 = vunpack.c.l.b16 %v382
        %v391 = vunpack.c.l.b16 %v383
        %v392 = vunpack.c.l.b16 %v384
        %v393 = vunpack.c.l.b16 %v385
        %v394 = vpack.c.b16 %v391, %v390
        %v395 = vpack.c.b16 %v393, %v392
        %vm398 = vcmask 261120
        %v400 = vsel %vm398, %v375, 0
        %402 = vmatprep.subr.bf16.mxu0 0
        %403 = vmatpush1.bf16.msra.mxu0 0
        %404 = vmatprep.subr.bf16.mxu0 0
        %405 = vmatpush1.bf16.msra.mxu0 0
        %406 = vmatprep.subr.bf16.mxu0 0
        %407 = vmatpush1.bf16.msra.mxu0 0
        %408 = vmatprep.subr.bf16.mxu0 0
        %409 = vmatpush1.bf16.msra.mxu0 0
        %410 = vmatprep.subr.bf16.mxu0 0
        %411 = vmatpush1.bf16.msra.mxu0 0
        %412 = vmatprep.subr.bf16.mxu0 0
        %413 = vmatpush1.bf16.msra.mxu0 0
        %414 = vmatprep.subr.bf16.mxu0 0
        %415 = vmatpush1.bf16.msra.mxu0 %v395
        %416 = vmatprep.subr.bf16.mxu0 0
        %417 = vmatpush1.bf16.msra.mxu0 %v394
        %418 = vmatprep.subr.bf16.mxu0 0
        %419 = vmatpush2.bf16.msra.mxu0 0
        %420 = vmatprep.subr.bf16.mxu0 0
        %421 = vmatpush2.bf16.msra.mxu0 0
        %422 = vmatprep.subr.bf16.mxu0 0
        %423 = vmatpush2.bf16.msra.mxu0 0
        %424 = vmatprep.subr.bf16.mxu0 0
        %425 = vmatpush2.bf16.msra.mxu0 0
        %426 = vmatprep.subr.bf16.mxu0 0
        %427 = vmatpush2.bf16.msra.mxu0 0
        %428 = vmatprep.subr.bf16.mxu0 0
        %429 = vmatpush2.bf16.msra.mxu0 0
        %430 = vmatprep.subr.bf16.mxu0 0
        %431 = vmatpush2.bf16.msra.mxu0 0
        %432 = vmatprep.subr.bf16.mxu0 0
        %433 = vmatpush2.bf16.msra.mxu0 0
        %434 = vmatprep.mubr.bf16.mxu0 0
        %435 = vmatmul.mubr.bf16.gmra.mxu0 %v400
        %v436 = vpop.f32.mrf.mxu0
        %v437 = vadd.f32 0.0, %v436
        %v438 = vpop.f32.mrf.mxu0
        %v439 = vpop.f32.mrf.mxu0
        %v440 = vadd.f32 0.0, %v439
        %v441 = vpop.f32.mrf.mxu0
        %442 = vdwg.mxu0
        %v443 = vmul.f32 %v437, 0.35355338
        %v444 = vmul.f32 %v440, 0.35355338
        %v445 = vpack.c.bf16 %v444, %v443
        %v446 = vld [vmem:[#allocation8] sm:$0xf]
        %v447 = vld [vmem:[#allocation8 + $0x4] sm:$0xf]
        %v448 = vld [vmem:[#allocation8 + $0x8] sm:$0xf]
        %v449 = vld [vmem:[#allocation8 + $0xc] sm:$0xf]
        %v454 = vunpack.c.l.b16 %v446
        %v455 = vunpack.c.l.b16 %v447
        %v456 = vunpack.c.l.b16 %v448
        %v457 = vunpack.c.l.b16 %v449
        %v458 = vpack.c.b16 %v455, %v454
        %v459 = vpack.c.b16 %v457, %v456
        %v463 = vsel %vm398, %v380, 0
        %v466 = vsel %vm398, %v381, 0
        %468 = vmatprep.subr.bf16.mxu0 0
        %469 = vmatpush1.bf16.msra.mxu0 0
        %470 = vmatprep.subr.bf16.mxu0 0
        %471 = vmatpush1.bf16.msra.mxu0 0
        %472 = vmatprep.subr.bf16.mxu0 0
        %473 = vmatpush1.bf16.msra.mxu0 0
        %474 = vmatprep.subr.bf16.mxu0 0
        %475 = vmatpush1.bf16.msra.mxu0 0
        %476 = vmatprep.subr.bf16.mxu0 0
        %477 = vmatpush1.bf16.msra.mxu0 0
        %478 = vmatprep.subr.bf16.mxu0 0
        %479 = vmatpush1.bf16.msra.mxu0 0
        %480 = vmatprep.subr.bf16.mxu0 0
        %481 = vmatpush1.bf16.msra.mxu0 %v459
        %482 = vmatprep.subr.bf16.mxu0 0
        %483 = vmatpush1.bf16.msra.mxu0 %v458
        %484 = vmatprep.subr.bf16.mxu0 0
        %485 = vmatpush2.bf16.msra.mxu0 0
        %486 = vmatprep.subr.bf16.mxu0 0
        %487 = vmatpush2.bf16.msra.mxu0 0
        %488 = vmatprep.subr.bf16.mxu0 0
        %489 = vmatpush2.bf16.msra.mxu0 0
        %490 = vmatprep.subr.bf16.mxu0 0
        %491 = vmatpush2.bf16.msra.mxu0 0
        %492 = vmatprep.subr.bf16.mxu0 0
        %493 = vmatpush2.bf16.msra.mxu0 0
        %494 = vmatprep.subr.bf16.mxu0 0
        %495 = vmatpush2.bf16.msra.mxu0 0
        %496 = vmatprep.subr.bf16.mxu0 0
        %497 = vmatpush2.bf16.msra.mxu0 0
        %498 = vmatprep.subr.bf16.mxu0 0
        %499 = vmatpush2.bf16.msra.mxu0 0
        %500 = vmatprep.mubr.bf16.mxu0 0
        %501 = vmatmul.mubr.bf16.gmra.mxu0 %v463
        %v502 = vpop.f32.mrf.mxu0
        %v503 = vadd.f32 0.0, %v502
        %v504 = vpop.f32.mrf.mxu0
        %v505 = vpop.f32.mrf.mxu0
        %v506 = vadd.f32 0.0, %v505
        %v507 = vpop.f32.mrf.mxu0
        %508 = vmatprep.mubr.bf16.mxu0 0
        %509 = vmatmul.mubr.bf16.gmra.mxu0 %v466
        %v510 = vpop.f32.mrf.mxu0
        %v511 = vadd.f32 0.0, %v510
        %v512 = vpop.f32.mrf.mxu0
        %v513 = vpop.f32.mrf.mxu0
        %v514 = vadd.f32 0.0, %v513
        %v515 = vpop.f32.mrf.mxu0
        %516 = vdwg.mxu0
        %v517 = vpack.c.bf16 %v506, %v503
        %v518 = vpack.c.bf16 %v514, %v511
        %v519 = vld [vmem:[#allocation10] sm:$0xf]
        %v520 = vld [vmem:[#allocation10 + $0x4] sm:$0xf]
        %v521 = vld [vmem:[#allocation10 + $0x8] sm:$0xf]
        %v522 = vld [vmem:[#allocation10 + $0xc] sm:$0xf]
        %v527 = vunpack.c.l.b16 %v519
        %v528 = vunpack.c.l.b16 %v520
        %v529 = vunpack.c.l.b16 %v521
        %v530 = vunpack.c.l.b16 %v522
        %v531 = vpack.c.b16 %v528, %v527
        %v532 = vpack.c.b16 %v530, %v529
        %535 = vmatprep.subr.bf16.mxu0 0
        %536 = vmatpush1.bf16.msra.mxu0 0
        %537 = vmatprep.subr.bf16.mxu0 0
        %538 = vmatpush1.bf16.msra.mxu0 0
        %539 = vmatprep.subr.bf16.mxu0 0
        %540 = vmatpush1.bf16.msra.mxu0 0
        %541 = vmatprep.subr.bf16.mxu0 0
        %542 = vmatpush1.bf16.msra.mxu0 0
        %543 = vmatprep.subr.bf16.mxu0 0
        %544 = vmatpush1.bf16.msra.mxu0 0
        %545 = vmatprep.subr.bf16.mxu0 0
        %546 = vmatpush1.bf16.msra.mxu0 0
        %547 = vmatprep.subr.bf16.mxu0 0
        %548 = vmatpush1.bf16.msra.mxu0 %v532
        %549 = vmatprep.subr.bf16.mxu0 0
        %550 = vmatpush1.bf16.msra.mxu0 %v531
        %551 = vmatprep.subr.bf16.mxu0 0
        %552 = vmatpush2.bf16.msra.mxu0 0
        %553 = vmatprep.subr.bf16.mxu0 0
        %554 = vmatpush2.bf16.msra.mxu0 0
        %555 = vmatprep.subr.bf16.mxu0 0
        %556 = vmatpush2.bf16.msra.mxu0 0
        %557 = vmatprep.subr.bf16.mxu0 0
        %558 = vmatpush2.bf16.msra.mxu0 0
        %559 = vmatprep.subr.bf16.mxu0 0
        %560 = vmatpush2.bf16.msra.mxu0 0
        %561 = vmatprep.subr.bf16.mxu0 0
        %562 = vmatpush2.bf16.msra.mxu0 0
        %563 = vmatprep.subr.bf16.mxu0 0
        %564 = vmatpush2.bf16.msra.mxu0 0
        %565 = vmatprep.subr.bf16.mxu0 0
        %566 = vmatpush2.bf16.msra.mxu0 0
        %567 = vmatprep.mubr.bf16.mxu0 0
        %568 = vmatmul.mubr.bf16.gmra.mxu0 %v463
        %v569 = vpop.f32.mrf.mxu0
        %v570 = vadd.f32 0.0, %v569
        %v571 = vpop.f32.mrf.mxu0
        %v572 = vpop.f32.mrf.mxu0
        %v573 = vadd.f32 0.0, %v572
        %v574 = vpop.f32.mrf.mxu0
        %575 = vmatprep.mubr.bf16.mxu0 0
        %576 = vmatmul.mubr.bf16.gmra.mxu0 %v466
        %v577 = vpop.f32.mrf.mxu0
        %v578 = vadd.f32 0.0, %v577
        %v579 = vpop.f32.mrf.mxu0
        %v580 = vpop.f32.mrf.mxu0
        %v581 = vadd.f32 0.0, %v580
        %v582 = vpop.f32.mrf.mxu0
        %583 = vdwg.mxu0
        %v584 = vpack.c.bf16 %v573, %v570
        %v585 = vpack.c.bf16 %v581, %v578
        %vm586 = vcmask 64512
        %v588 = vsel %vm586, %v445, 0
        %v591 = vsel %vm586, %v517, 0
        %593 = vmatprep.subr.bf16.mxu0 0
        %594 = vmatpush1.bf16.xpose.msra.mxu0 0
        %595 = vmatprep.subr.bf16.mxu0 0
        %596 = vmatpush1.bf16.xpose.msra.mxu0 0
        %597 = vmatprep.subr.bf16.mxu0 0
        %598 = vmatpush1.bf16.xpose.msra.mxu0 0
        %599 = vmatprep.subr.bf16.mxu0 0
        %600 = vmatpush1.bf16.xpose.msra.mxu0 0
        %601 = vmatprep.subr.bf16.mxu0 0
        %602 = vmatpush1.bf16.xpose.msra.mxu0 0
        %603 = vmatprep.subr.bf16.mxu0 0
        %604 = vmatpush1.bf16.xpose.msra.mxu0 0
        %605 = vmatprep.subr.bf16.mxu0 0
        %606 = vmatpush1.bf16.xpose.msra.mxu0 0
        %607 = vmatprep.subr.bf16.mxu0 0
        %608 = vmatpush1.bf16.xpose.msra.mxu0 %v591
        %609 = vmatprep.subr.bf16.mxu0 0
        %610 = vmatpush2.bf16.xpose.msra.mxu0 0
        %611 = vmatprep.subr.bf16.mxu0 0
        %612 = vmatpush2.bf16.xpose.msra.mxu0 0
        %613 = vmatprep.subr.bf16.mxu0 0
        %614 = vmatpush2.bf16.xpose.msra.mxu0 0
        %615 = vmatprep.subr.bf16.mxu0 0
        %616 = vmatpush2.bf16.xpose.msra.mxu0 0
        %617 = vmatprep.subr.bf16.mxu0 0
        %618 = vmatpush2.bf16.xpose.msra.mxu0 0
        %619 = vmatprep.subr.bf16.mxu0 0
        %620 = vmatpush2.bf16.xpose.msra.mxu0 0
        %621 = vmatprep.subr.bf16.mxu0 0
        %622 = vmatpush2.bf16.xpose.msra.mxu0 0
        %623 = vmatprep.subr.bf16.mxu0 0
        %624 = vmatpush2.bf16.xpose.msra.mxu0 0
        %625 = vmatprep.mubr.bf16.mxu0 0
        %626 = vmatmul.mubr.bf16.gmra.mxu0 %v588
        %v627 = vpop.f32.mrf.mxu0
        %v628 = vadd.f32 0.0, %v627
        %v629 = vpop.f32.mrf.mxu0
        %v630 = vpop.f32.mrf.mxu0
        %v631 = vpop.f32.mrf.mxu0
        %632 = vdwg.mxu0
        %vm633 = vcmask 130048
        %v634 = vsel %vm633, %v628, -inf
        %635 = vmax.xlane.f32.xlu0 %v634
        %v636 = vpop.xlane.xlu0 %635
        %v637 = vsub.f32 %v628, %v636
        %v638 = vmul.f32 %v637, 1.442695
        %v639 = vpow.pop %v638
        %v640 = vsel %vm633, %v639, 0.0
        %641 = vadd.xlane.f32.xlu0 %v640
        %v642 = vpop.xlane.xlu0 %641
        %v643 = vrcp.pop %v642
        %v644 = vmul.f32 %v639, %v643
        %v645 = vpack.c.bf16 %v644, %v644
        %v647 = vsel %vm633, %v645, 0
        %649 = vmatprep.subr.bf16.mxu0 0
        %650 = vmatpush1.bf16.msra.mxu0 0
        %651 = vmatprep.subr.bf16.mxu0 0
        %652 = vmatpush1.bf16.msra.mxu0 0
        %653 = vmatprep.subr.bf16.mxu0 0
        %654 = vmatpush1.bf16.msra.mxu0 0
        %655 = vmatprep.subr.bf16.mxu0 0
        %656 = vmatpush1.bf16.msra.mxu0 0
        %657 = vmatprep.subr.bf16.mxu0 0
        %658 = vmatpush1.bf16.msra.mxu0 0
        %659 = vmatprep.subr.bf16.mxu0 0
        %660 = vmatpush1.bf16.msra.mxu0 0
        %661 = vmatprep.subr.bf16.mxu0 0
        %662 = vmatpush1.bf16.msra.mxu0 0
        %663 = vmatprep.subr.bf16.mxu0 0
        %664 = vmatpush1.bf16.msra.mxu0 %v584
        %665 = vmatprep.subr.bf16.mxu0 0
        %666 = vmatpush2.bf16.msra.mxu0 0
        %667 = vmatprep.subr.bf16.mxu0 0
        %668 = vmatpush2.bf16.msra.mxu0 0
        %669 = vmatprep.subr.bf16.mxu0 0
        %670 = vmatpush2.bf16.msra.mxu0 0
        %671 = vmatprep.subr.bf16.mxu0 0
        %672 = vmatpush2.bf16.msra.mxu0 0
        %673 = vmatprep.subr.bf16.mxu0 0
        %674 = vmatpush2.bf16.msra.mxu0 0
        %675 = vmatprep.subr.bf16.mxu0 0
        %676 = vmatpush2.bf16.msra.mxu0 0
        %677 = vmatprep.subr.bf16.mxu0 0
        %678 = vmatpush2.bf16.msra.mxu0 0
        %679 = vmatprep.subr.bf16.mxu0 0
        %680 = vmatpush2.bf16.msra.mxu0 0
        %681 = vmatprep.mubr.bf16.mxu0 0
        %682 = vmatmul.mubr.bf16.gmra.mxu0 %v647
        %v683 = vpop.f32.mrf.mxu0
        %v684 = vadd.f32 0.0, %v683
        %v685 = vpop.f32.mrf.mxu0
        %v686 = vpop.f32.mrf.mxu0
        %v687 = vpop.f32.mrf.mxu0
        %688 = vdwg.mxu0
        %v689 = vpack.c.bf16 %v684, %v684
        %v690 = vld [vmem:[#allocation11] sm:$0xf]
        %692 = vrot.lane.b32.xlu0 %v445, 120
        %v693 = vpop.permute.xlu0 %692
        %695 = vrot.lane.b32.xlu0 %v517, 120
        %v696 = vpop.permute.xlu0 %695
        %v698 = vsel %vm586, %v693, 0
        %v701 = vsel %vm586, %v696, 0
        %703 = vmatprep.subr.bf16.mxu0 0
        %704 = vmatpush1.bf16.xpose.msra.mxu0 0
        %705 = vmatprep.subr.bf16.mxu0 0
        %706 = vmatpush1.bf16.xpose.msra.mxu0 0
        %707 = vmatprep.subr.bf16.mxu0 0
        %708 = vmatpush1.bf16.xpose.msra.mxu0 0
        %709 = vmatprep.subr.bf16.mxu0 0
        %710 = vmatpush1.bf16.xpose.msra.mxu0 0
        %711 = vmatprep.subr.bf16.mxu0 0
        %712 = vmatpush1.bf16.xpose.msra.mxu0 0
        %713 = vmatprep.subr.bf16.mxu0 0
        %714 = vmatpush1.bf16.xpose.msra.mxu0 0
        %715 = vmatprep.subr.bf16.mxu0 0
        %716 = vmatpush1.bf16.xpose.msra.mxu0 0
        %717 = vmatprep.subr.bf16.mxu0 0
        %718 = vmatpush1.bf16.xpose.msra.mxu0 %v701
        %719 = vmatprep.subr.bf16.mxu0 0
        %720 = vmatpush2.bf16.xpose.msra.mxu0 0
        %721 = vmatprep.subr.bf16.mxu0 0
        %722 = vmatpush2.bf16.xpose.msra.mxu0 0
        %723 = vmatprep.subr.bf16.mxu0 0
        %724 = vmatpush2.bf16.xpose.msra.mxu0 0
        %725 = vmatprep.subr.bf16.mxu0 0
        %726 = vmatpush2.bf16.xpose.msra.mxu0 0
        %727 = vmatprep.subr.bf16.mxu0 0
        %728 = vmatpush2.bf16.xpose.msra.mxu0 0
        %729 = vmatprep.subr.bf16.mxu0 0
        %730 = vmatpush2.bf16.xpose.msra.mxu0 0
        %731 = vmatprep.subr.bf16.mxu0 0
        %732 = vmatpush2.bf16.xpose.msra.mxu0 0
        %733 = vmatprep.subr.bf16.mxu0 0
        %734 = vmatpush2.bf16.xpose.msra.mxu0 0
        %735 = vmatprep.mubr.bf16.mxu0 0
        %736 = vmatmul.mubr.bf16.gmra.mxu0 %v698
        %v737 = vpop.f32.mrf.mxu0
        %v738 = vadd.f32 0.0, %v737
        %v739 = vpop.f32.mrf.mxu0
        %v740 = vpop.f32.mrf.mxu0
        %v741 = vpop.f32.mrf.mxu0
        %742 = vdwg.mxu0
        %v743 = vsel %vm633, %v738, -inf
        %744 = vmax.xlane.f32.xlu0 %v743
        %v745 = vpop.xlane.xlu0 %744
        %v746 = vsub.f32 %v738, %v745
        %v747 = vmul.f32 %v746, 1.442695
        %v748 = vpow.pop %v747
        %v749 = vsel %vm633, %v748, 0.0
        %750 = vadd.xlane.f32.xlu0 %v749
        %v751 = vpop.xlane.xlu0 %750
        %v752 = vrcp.pop %v751
        %v753 = vmul.f32 %v748, %v752
        %v754 = vpack.c.bf16 %v753, %v753
        %756 = vrot.lane.b32.xlu0 %v584, 120
        %v757 = vpop.permute.xlu0 %756
        %v760 = vsel %vm633, %v754, 0
        %762 = vmatprep.subr.bf16.mxu0 0
        %763 = vmatpush1.bf16.msra.mxu0 0
        %764 = vmatprep.subr.bf16.mxu0 0
        %765 = vmatpush1.bf16.msra.mxu0 0
        %766 = vmatprep.subr.bf16.mxu0 0
        %767 = vmatpush1.bf16.msra.mxu0 0
        %768 = vmatprep.subr.bf16.mxu0 0
        %769 = vmatpush1.bf16.msra.mxu0 0
        %770 = vmatprep.subr.bf16.mxu0 0
        %771 = vmatpush1.bf16.msra.mxu0 0
        %772 = vmatprep.subr.bf16.mxu0 0
        %773 = vmatpush1.bf16.msra.mxu0 0
        %774 = vmatprep.subr.bf16.mxu0 0
        %775 = vmatpush1.bf16.msra.mxu0 0
        %776 = vmatprep.subr.bf16.mxu0 0
        %777 = vmatpush1.bf16.msra.mxu0 %v757
        %778 = vmatprep.subr.bf16.mxu0 0
        %779 = vmatpush2.bf16.msra.mxu0 0
        %780 = vmatprep.subr.bf16.mxu0 0
        %781 = vmatpush2.bf16.msra.mxu0 0
        %782 = vmatprep.subr.bf16.mxu0 0
        %783 = vmatpush2.bf16.msra.mxu0 0
        %784 = vmatprep.subr.bf16.mxu0 0
        %785 = vmatpush2.bf16.msra.mxu0 0
        %786 = vmatprep.subr.bf16.mxu0 0
        %787 = vmatpush2.bf16.msra.mxu0 0
        %788 = vmatprep.subr.bf16.mxu0 0
        %789 = vmatpush2.bf16.msra.mxu0 0
        %790 = vmatprep.subr.bf16.mxu0 0
        %791 = vmatpush2.bf16.msra.mxu0 0
        %792 = vmatprep.subr.bf16.mxu0 0
        %793 = vmatpush2.bf16.msra.mxu0 0
        %794 = vmatprep.mubr.bf16.mxu0 0
        %795 = vmatmul.mubr.bf16.gmra.mxu0 %v760
        %v796 = vpop.f32.mrf.mxu0
        %v797 = vadd.f32 0.0, %v796
        %v798 = vpop.f32.mrf.mxu0
        %v799 = vpop.f32.mrf.mxu0
        %v800 = vpop.f32.mrf.mxu0
        %801 = vdwg.mxu0
        %v802 = vpack.c.bf16 %v797, %v797
        %v803 = vld [vmem:[#allocation11 + $0x4] sm:$0xf]
        %v805 = vsel %vm586, %v802, 0
        %vm807 = vcmask 1043456
        %v809 = vsel %vm807, %v803, 0
        %811 = vmatprep.subr.bf16.mxu0 0
        %812 = vmatpush1.bf16.msra.mxu0 0
        %813 = vmatprep.subr.bf16.mxu0 0
        %814 = vmatpush1.bf16.msra.mxu0 0
        %815 = vmatprep.subr.bf16.mxu0 0
        %816 = vmatpush1.bf16.msra.mxu0 0
        %817 = vmatprep.subr.bf16.mxu0 0
        %818 = vmatpush1.bf16.msra.mxu0 0
        %819 = vmatprep.subr.bf16.mxu0 0
        %820 = vmatpush1.bf16.msra.mxu0 0
        %821 = vmatprep.subr.bf16.mxu0 0
        %822 = vmatpush1.bf16.msra.mxu0 0
        %823 = vmatprep.subr.bf16.mxu0 0
        %824 = vmatpush1.bf16.msra.mxu0 0
        %825 = vmatprep.subr.bf16.mxu0 0
        %826 = vmatpush1.bf16.msra.mxu0 %v809
        %827 = vmatprep.subr.bf16.mxu0 0
        %828 = vmatpush2.bf16.msra.mxu0 0
        %829 = vmatprep.subr.bf16.mxu0 0
        %830 = vmatpush2.bf16.msra.mxu0 0
        %831 = vmatprep.subr.bf16.mxu0 0
        %832 = vmatpush2.bf16.msra.mxu0 0
        %833 = vmatprep.subr.bf16.mxu0 0
        %834 = vmatpush2.bf16.msra.mxu0 0
        %835 = vmatprep.subr.bf16.mxu0 0
        %836 = vmatpush2.bf16.msra.mxu0 0
        %837 = vmatprep.subr.bf16.mxu0 0
        %838 = vmatpush2.bf16.msra.mxu0 0
        %839 = vmatprep.subr.bf16.mxu0 0
        %840 = vmatpush2.bf16.msra.mxu0 0
        %841 = vmatprep.subr.bf16.mxu0 0
        %842 = vmatpush2.bf16.msra.mxu0 0
        %843 = vmatprep.mubr.bf16.mxu0 0
        %844 = vmatmul.mubr.bf16.gmra.mxu0 %v805
        %v845 = vpop.f32.mrf.mxu0
        %v846 = vadd.f32 0.0, %v845
        %v847 = vpop.f32.mrf.mxu0
        %v848 = vpop.f32.mrf.mxu0
        %v849 = vpop.f32.mrf.mxu0
        %850 = vdwg.mxu0
        %v852 = vsel %vm586, %v689, 0
        %v855 = vsel %vm807, %v690, 0
        %857 = vmatprep.subr.bf16.mxu0 0
        %858 = vmatpush1.bf16.msra.mxu0 0
        %859 = vmatprep.subr.bf16.mxu0 0
        %860 = vmatpush1.bf16.msra.mxu0 0
        %861 = vmatprep.subr.bf16.mxu0 0
        %862 = vmatpush1.bf16.msra.mxu0 0
        %863 = vmatprep.subr.bf16.mxu0 0
        %864 = vmatpush1.bf16.msra.mxu0 0
        %865 = vmatprep.subr.bf16.mxu0 0
        %866 = vmatpush1.bf16.msra.mxu0 0
        %867 = vmatprep.subr.bf16.mxu0 0
        %868 = vmatpush1.bf16.msra.mxu0 0
        %869 = vmatprep.subr.bf16.mxu0 0
        %870 = vmatpush1.bf16.msra.mxu0 0
        %871 = vmatprep.subr.bf16.mxu0 0
        %872 = vmatpush1.bf16.msra.mxu0 %v855
        %873 = vmatprep.subr.bf16.mxu0 0
        %874 = vmatpush2.bf16.msra.mxu0 0
        %875 = vmatprep.subr.bf16.mxu0 0
        %876 = vmatpush2.bf16.msra.mxu0 0
        %877 = vmatprep.subr.bf16.mxu0 0
        %878 = vmatpush2.bf16.msra.mxu0 0
        %879 = vmatprep.subr.bf16.mxu0 0
        %880 = vmatpush2.bf16.msra.mxu0 0
        %881 = vmatprep.subr.bf16.mxu0 0
        %882 = vmatpush2.bf16.msra.mxu0 0
        %883 = vmatprep.subr.bf16.mxu0 0
        %884 = vmatpush2.bf16.msra.mxu0 0
        %885 = vmatprep.subr.bf16.mxu0 0
        %886 = vmatpush2.bf16.msra.mxu0 0
        %887 = vmatprep.subr.bf16.mxu0 0
        %888 = vmatpush2.bf16.msra.mxu0 0
        %889 = vmatprep.mubr.bf16.mxu0 0
        %890 = vmatmul.mubr.bf16.gmra.mxu0 %v852
        %v891 = vpop.f32.mrf.mxu0
        %v892 = vadd.f32 %v846, %v891
        %v893 = vpop.f32.mrf.mxu0
        %v894 = vpop.f32.mrf.mxu0
        %v895 = vpop.f32.mrf.mxu0
        %896 = vdwg.mxu0
        %897 = vrot.lane.b32.xlu0 %v445, 112
        %v898 = vpop.permute.xlu0 %897
        %899 = vrot.lane.b32.xlu0 %v517, 112
        %v900 = vpop.permute.xlu0 %899
        %v902 = vsel %vm586, %v898, 0
        %v905 = vsel %vm586, %v900, 0
        %907 = vmatprep.subr.bf16.mxu0 0
        %908 = vmatpush1.bf16.xpose.msra.mxu0 0
        %909 = vmatprep.subr.bf16.mxu0 0
        %910 = vmatpush1.bf16.xpose.msra.mxu0 0
        %911 = vmatprep.subr.bf16.mxu0 0
        %912 = vmatpush1.bf16.xpose.msra.mxu0 0
        %913 = vmatprep.subr.bf16.mxu0 0
        %914 = vmatpush1.bf16.xpose.msra.mxu0 0
        %915 = vmatprep.subr.bf16.mxu0 0
        %916 = vmatpush1.bf16.xpose.msra.mxu0 0
        %917 = vmatprep.subr.bf16.mxu0 0
        %918 = vmatpush1.bf16.xpose.msra.mxu0 0
        %919 = vmatprep.subr.bf16.mxu0 0
        %920 = vmatpush1.bf16.xpose.msra.mxu0 0
        %921 = vmatprep.subr.bf16.mxu0 0
        %922 = vmatpush1.bf16.xpose.msra.mxu0 %v905
        %923 = vmatprep.subr.bf16.mxu0 0
        %924 = vmatpush2.bf16.xpose.msra.mxu0 0
        %925 = vmatprep.subr.bf16.mxu0 0
        %926 = vmatpush2.bf16.xpose.msra.mxu0 0
        %927 = vmatprep.subr.bf16.mxu0 0
        %928 = vmatpush2.bf16.xpose.msra.mxu0 0
        %929 = vmatprep.subr.bf16.mxu0 0
        %930 = vmatpush2.bf16.xpose.msra.mxu0 0
        %931 = vmatprep.subr.bf16.mxu0 0
        %932 = vmatpush2.bf16.xpose.msra.mxu0 0
        %933 = vmatprep.subr.bf16.mxu0 0
        %934 = vmatpush2.bf16.xpose.msra.mxu0 0
        %935 = vmatprep.subr.bf16.mxu0 0
        %936 = vmatpush2.bf16.xpose.msra.mxu0 0
        %937 = vmatprep.subr.bf16.mxu0 0
        %938 = vmatpush2.bf16.xpose.msra.mxu0 0
        %939 = vmatprep.mubr.bf16.mxu0 0
        %940 = vmatmul.mubr.bf16.gmra.mxu0 %v902
        %v941 = vpop.f32.mrf.mxu0
        %v942 = vadd.f32 0.0, %v941
        %v943 = vpop.f32.mrf.mxu0
        %v944 = vpop.f32.mrf.mxu0
        %v945 = vpop.f32.mrf.mxu0
        %946 = vdwg.mxu0
        %v947 = vsel %vm633, %v942, -inf
        %948 = vmax.xlane.f32.xlu0 %v947
        %v949 = vpop.xlane.xlu0 %948
        %v950 = vsub.f32 %v942, %v949
        %v951 = vmul.f32 %v950, 1.442695
        %v952 = vpow.pop %v951
        %v953 = vsel %vm633, %v952, 0.0
        %954 = vadd.xlane.f32.xlu0 %v953
        %v955 = vpop.xlane.xlu0 %954
        %v956 = vrcp.pop %v955
        %v957 = vmul.f32 %v952, %v956
        %v958 = vpack.c.bf16 %v957, %v957
        %959 = vrot.lane.b32.xlu0 %v584, 112
        %v960 = vpop.permute.xlu0 %959
        %v963 = vsel %vm633, %v958, 0
        %965 = vmatprep.subr.bf16.mxu0 0
        %966 = vmatpush1.bf16.msra.mxu0 0
        %967 = vmatprep.subr.bf16.mxu0 0
        %968 = vmatpush1.bf16.msra.mxu0 0
        %969 = vmatprep.subr.bf16.mxu0 0
        %970 = vmatpush1.bf16.msra.mxu0 0
        %971 = vmatprep.subr.bf16.mxu0 0
        %972 = vmatpush1.bf16.msra.mxu0 0
        %973 = vmatprep.subr.bf16.mxu0 0
        %974 = vmatpush1.bf16.msra.mxu0 0
        %975 = vmatprep.subr.bf16.mxu0 0
        %976 = vmatpush1.bf16.msra.mxu0 0
        %977 = vmatprep.subr.bf16.mxu0 0
        %978 = vmatpush1.bf16.msra.mxu0 0
        %979 = vmatprep.subr.bf16.mxu0 0
        %980 = vmatpush1.bf16.msra.mxu0 %v960
        %981 = vmatprep.subr.bf16.mxu0 0
        %982 = vmatpush2.bf16.msra.mxu0 0
        %983 = vmatprep.subr.bf16.mxu0 0
        %984 = vmatpush2.bf16.msra.mxu0 0
        %985 = vmatprep.subr.bf16.mxu0 0
        %986 = vmatpush2.bf16.msra.mxu0 0
        %987 = vmatprep.subr.bf16.mxu0 0
        %988 = vmatpush2.bf16.msra.mxu0 0
        %989 = vmatprep.subr.bf16.mxu0 0
        %990 = vmatpush2.bf16.msra.mxu0 0
        %991 = vmatprep.subr.bf16.mxu0 0
        %992 = vmatpush2.bf16.msra.mxu0 0
        %993 = vmatprep.subr.bf16.mxu0 0
        %994 = vmatpush2.bf16.msra.mxu0 0
        %995 = vmatprep.subr.bf16.mxu0 0
        %996 = vmatpush2.bf16.msra.mxu0 0
        %997 = vmatprep.mubr.bf16.mxu0 0
        %998 = vmatmul.mubr.bf16.gmra.mxu0 %v963
        %v999 = vpop.f32.mrf.mxu0
        %v1000 = vadd.f32 0.0, %v999
        %v1001 = vpop.f32.mrf.mxu0
        %v1002 = vpop.f32.mrf.mxu0
        %v1003 = vpop.f32.mrf.mxu0
        %1004 = vdwg.mxu0
        %v1005 = vpack.c.bf16 %v1000, %v1000
        %v1006 = vld [vmem:[#allocation11 + $0x8] sm:$0xf]
        %v1008 = vsel %vm586, %v1005, 0
        %v1011 = vsel %vm807, %v1006, 0
        %1013 = vmatprep.subr.bf16.mxu0 0
        %1014 = vmatpush1.bf16.msra.mxu0 0
        %1015 = vmatprep.subr.bf16.mxu0 0
        %1016 = vmatpush1.bf16.msra.mxu0 0
        %1017 = vmatprep.subr.bf16.mxu0 0
        %1018 = vmatpush1.bf16.msra.mxu0 0
        %1019 = vmatprep.subr.bf16.mxu0 0
        %1020 = vmatpush1.bf16.msra.mxu0 0
        %1021 = vmatprep.subr.bf16.mxu0 0
        %1022 = vmatpush1.bf16.msra.mxu0 0
        %1023 = vmatprep.subr.bf16.mxu0 0
        %1024 = vmatpush1.bf16.msra.mxu0 0
        %1025 = vmatprep.subr.bf16.mxu0 0
        %1026 = vmatpush1.bf16.msra.mxu0 0
        %1027 = vmatprep.subr.bf16.mxu0 0
        %1028 = vmatpush1.bf16.msra.mxu0 %v1011
        %1029 = vmatprep.subr.bf16.mxu0 0
        %1030 = vmatpush2.bf16.msra.mxu0 0
        %1031 = vmatprep.subr.bf16.mxu0 0
        %1032 = vmatpush2.bf16.msra.mxu0 0
        %1033 = vmatprep.subr.bf16.mxu0 0
        %1034 = vmatpush2.bf16.msra.mxu0 0
        %1035 = vmatprep.subr.bf16.mxu0 0
        %1036 = vmatpush2.bf16.msra.mxu0 0
        %1037 = vmatprep.subr.bf16.mxu0 0
        %1038 = vmatpush2.bf16.msra.mxu0 0
        %1039 = vmatprep.subr.bf16.mxu0 0
        %1040 = vmatpush2.bf16.msra.mxu0 0
        %1041 = vmatprep.subr.bf16.mxu0 0
        %1042 = vmatpush2.bf16.msra.mxu0 0
        %1043 = vmatprep.subr.bf16.mxu0 0
        %1044 = vmatpush2.bf16.msra.mxu0 0
        %1045 = vmatprep.mubr.bf16.mxu0 0
        %1046 = vmatmul.mubr.bf16.gmra.mxu0 %v1008
        %v1047 = vpop.f32.mrf.mxu0
        %v1048 = vadd.f32 0.0, %v1047
        %v1049 = vpop.f32.mrf.mxu0
        %v1050 = vpop.f32.mrf.mxu0
        %v1051 = vpop.f32.mrf.mxu0
        %1052 = vdwg.mxu0
        %v1053 = vadd.f32 %v892, %v1048
        %1054 = vrot.lane.b32.xlu0 %v445, 104
        %v1055 = vpop.permute.xlu0 %1054
        %1056 = vrot.lane.b32.xlu0 %v517, 104
        %v1057 = vpop.permute.xlu0 %1056
        %v1059 = vsel %vm586, %v1055, 0
        %v1062 = vsel %vm586, %v1057, 0
        %1064 = vmatprep.subr.bf16.mxu0 0
        %1065 = vmatpush1.bf16.xpose.msra.mxu0 0
        %1066 = vmatprep.subr.bf16.mxu0 0
        %1067 = vmatpush1.bf16.xpose.msra.mxu0 0
        %1068 = vmatprep.subr.bf16.mxu0 0
        %1069 = vmatpush1.bf16.xpose.msra.mxu0 0
        %1070 = vmatprep.subr.bf16.mxu0 0
        %1071 = vmatpush1.bf16.xpose.msra.mxu0 0
        %1072 = vmatprep.subr.bf16.mxu0 0
        %1073 = vmatpush1.bf16.xpose.msra.mxu0 0
        %1074 = vmatprep.subr.bf16.mxu0 0
        %1075 = vmatpush1.bf16.xpose.msra.mxu0 0
        %1076 = vmatprep.subr.bf16.mxu0 0
        %1077 = vmatpush1.bf16.xpose.msra.mxu0 0
        %1078 = vmatprep.subr.bf16.mxu0 0
        %1079 = vmatpush1.bf16.xpose.msra.mxu0 %v1062
        %1080 = vmatprep.subr.bf16.mxu0 0
        %1081 = vmatpush2.bf16.xpose.msra.mxu0 0
        %1082 = vmatprep.subr.bf16.mxu0 0
        %1083 = vmatpush2.bf16.xpose.msra.mxu0 0
        %1084 = vmatprep.subr.bf16.mxu0 0
        %1085 = vmatpush2.bf16.xpose.msra.mxu0 0
        %1086 = vmatprep.subr.bf16.mxu0 0
        %1087 = vmatpush2.bf16.xpose.msra.mxu0 0
        %1088 = vmatprep.subr.bf16.mxu0 0
        %1089 = vmatpush2.bf16.xpose.msra.mxu0 0
        %1090 = vmatprep.subr.bf16.mxu0 0
        %1091 = vmatpush2.bf16.xpose.msra.mxu0 0
        %1092 = vmatprep.subr.bf16.mxu0 0
        %1093 = vmatpush2.bf16.xpose.msra.mxu0 0
        %1094 = vmatprep.subr.bf16.mxu0 0
        %1095 = vmatpush2.bf16.xpose.msra.mxu0 0
        %1096 = vmatprep.mubr.bf16.mxu0 0
        %1097 = vmatmul.mubr.bf16.gmra.mxu0 %v1059
        %v1098 = vpop.f32.mrf.mxu0
        %v1099 = vadd.f32 0.0, %v1098
        %v1100 = vpop.f32.mrf.mxu0
        %v1101 = vpop.f32.mrf.mxu0
        %v1102 = vpop.f32.mrf.mxu0
        %1103 = vdwg.mxu0
        %v1104 = vsel %vm633, %v1099, -inf
        %1105 = vmax.xlane.f32.xlu0 %v1104
        %v1106 = vpop.xlane.xlu0 %1105
        %v1107 = vsub.f32 %v1099, %v1106
        %v1108 = vmul.f32 %v1107, 1.442695
        %v1109 = vpow.pop %v1108
        %v1110 = vsel %vm633, %v1109, 0.0
        %1111 = vadd.xlane.f32.xlu0 %v1110
        %v1112 = vpop.xlane.xlu0 %1111
        %v1113 = vrcp.pop %v1112
        %v1114 = vmul.f32 %v1109, %v1113
        %v1115 = vpack.c.bf16 %v1114, %v1114
        %1116 = vrot.lane.b32.xlu0 %v584, 104
        %v1117 = vpop.permute.xlu0 %1116
        %v1120 = vsel %vm633, %v1115, 0
        %1122 = vmatprep.subr.bf16.mxu0 0
        %1123 = vmatpush1.bf16.msra.mxu0 0
        %1124 = vmatprep.subr.bf16.mxu0 0
        %1125 = vmatpush1.bf16.msra.mxu0 0
        %1126 = vmatprep.subr.bf16.mxu0 0
        %1127 = vmatpush1.bf16.msra.mxu0 0
        %1128 = vmatprep.subr.bf16.mxu0 0
        %1129 = vmatpush1.bf16.msra.mxu0 0
        %1130 = vmatprep.subr.bf16.mxu0 0
        %1131 = vmatpush1.bf16.msra.mxu0 0
        %1132 = vmatprep.subr.bf16.mxu0 0
        %1133 = vmatpush1.bf16.msra.mxu0 0
        %1134 = vmatprep.subr.bf16.mxu0 0
        %1135 = vmatpush1.bf16.msra.mxu0 0
        %1136 = vmatprep.subr.bf16.mxu0 0
        %1137 = vmatpush1.bf16.msra.mxu0 %v1117
        %1138 = vmatprep.subr.bf16.mxu0 0
        %1139 = vmatpush2.bf16.msra.mxu0 0
        %1140 = vmatprep.subr.bf16.mxu0 0
        %1141 = vmatpush2.bf16.msra.mxu0 0
        %1142 = vmatprep.subr.bf16.mxu0 0
        %1143 = vmatpush2.bf16.msra.mxu0 0
        %1144 = vmatprep.subr.bf16.mxu0 0
        %1145 = vmatpush2.bf16.msra.mxu0 0
        %1146 = vmatprep.subr.bf16.mxu0 0
        %1147 = vmatpush2.bf16.msra.mxu0 0
        %1148 = vmatprep.subr.bf16.mxu0 0
        %1149 = vmatpush2.bf16.msra.mxu0 0
        %1150 = vmatprep.subr.bf16.mxu0 0
        %1151 = vmatpush2.bf16.msra.mxu0 0
        %1152 = vmatprep.subr.bf16.mxu0 0
        %1153 = vmatpush2.bf16.msra.mxu0 0
        %1154 = vmatprep.mubr.bf16.mxu0 0
        %1155 = vmatmul.mubr.bf16.gmra.mxu0 %v1120
        %v1156 = vpop.f32.mrf.mxu0
        %v1157 = vadd.f32 0.0, %v1156
        %v1158 = vpop.f32.mrf.mxu0
        %v1159 = vpop.f32.mrf.mxu0
        %v1160 = vpop.f32.mrf.mxu0
        %1161 = vdwg.mxu0
        %v1162 = vpack.c.bf16 %v1157, %v1157
        %v1163 = vld [vmem:[#allocation11 + $0xc] sm:$0xf]
        %v1165 = vsel %vm586, %v1162, 0
        %v1168 = vsel %vm807, %v1163, 0
        %1170 = vmatprep.subr.bf16.mxu0 0
        %1171 = vmatpush1.bf16.msra.mxu0 0
        %1172 = vmatprep.subr.bf16.mxu0 0
        %1173 = vmatpush1.bf16.msra.mxu0 0
        %1174 = vmatprep.subr.bf16.mxu0 0
        %1175 = vmatpush1.bf16.msra.mxu0 0
        %1176 = vmatprep.subr.bf16.mxu0 0
        %1177 = vmatpush1.bf16.msra.mxu0 0
        %1178 = vmatprep.subr.bf16.mxu0 0
        %1179 = vmatpush1.bf16.msra.mxu0 0
        %1180 = vmatprep.subr.bf16.mxu0 0
        %1181 = vmatpush1.bf16.msra.mxu0 0
        %1182 = vmatprep.subr.bf16.mxu0 0
        %1183 = vmatpush1.bf16.msra.mxu0 0
        %1184 = vmatprep.subr.bf16.mxu0 0
        %1185 = vmatpush1.bf16.msra.mxu0 %v1168
        %1186 = vmatprep.subr.bf16.mxu0 0
        %1187 = vmatpush2.bf16.msra.mxu0 0
        %1188 = vmatprep.subr.bf16.mxu0 0
        %1189 = vmatpush2.bf16.msra.mxu0 0
        %1190 = vmatprep.subr.bf16.mxu0 0
        %1191 = vmatpush2.bf16.msra.mxu0 0
        %1192 = vmatprep.subr.bf16.mxu0 0
        %1193 = vmatpush2.bf16.msra.mxu0 0
        %1194 = vmatprep.subr.bf16.mxu0 0
        %1195 = vmatpush2.bf16.msra.mxu0 0
        %1196 = vmatprep.subr.bf16.mxu0 0
        %1197 = vmatpush2.bf16.msra.mxu0 0
        %1198 = vmatprep.subr.bf16.mxu0 0
        %1199 = vmatpush2.bf16.msra.mxu0 0
        %1200 = vmatprep.subr.bf16.mxu0 0
        %1201 = vmatpush2.bf16.msra.mxu0 0
        %1202 = vmatprep.mubr.bf16.mxu0 0
        %1203 = vmatmul.mubr.bf16.gmra.mxu0 %v1165
        %v1204 = vpop.f32.mrf.mxu0
        %v1205 = vadd.f32 0.0, %v1204
        %v1206 = vpop.f32.mrf.mxu0
        %v1207 = vpop.f32.mrf.mxu0
        %v1208 = vpop.f32.mrf.mxu0
        %1209 = vdwg.mxu0
        %v1210 = vadd.f32 %v1053, %v1205
        %1211 = vst.msk [vmem:[%s368] sm:$0xff] %vm398, %v1210
        %v1212 = vrot.slane %v445, 4
        %v1214 = vsel %vm586, %v1212, 0
        %v1217 = vsel %vm586, %v518, 0
        %1219 = vmatprep.subr.bf16.mxu0 0
        %1220 = vmatpush1.bf16.xpose.msra.mxu0 0
        %1221 = vmatprep.subr.bf16.mxu0 0
        %1222 = vmatpush1.bf16.xpose.msra.mxu0 0
        %1223 = vmatprep.subr.bf16.mxu0 0
        %1224 = vmatpush1.bf16.xpose.msra.mxu0 0
        %1225 = vmatprep.subr.bf16.mxu0 0
        %1226 = vmatpush1.bf16.xpose.msra.mxu0 0
        %1227 = vmatprep.subr.bf16.mxu0 0
        %1228 = vmatpush1.bf16.xpose.msra.mxu0 0
        %1229 = vmatprep.subr.bf16.mxu0 0
        %1230 = vmatpush1.bf16.xpose.msra.mxu0 0
        %1231 = vmatprep.subr.bf16.mxu0 0
        %1232 = vmatpush1.bf16.xpose.msra.mxu0 0
        %1233 = vmatprep.subr.bf16.mxu0 0
        %1234 = vmatpush1.bf16.xpose.msra.mxu0 %v1217
        %1235 = vmatprep.subr.bf16.mxu0 0
        %1236 = vmatpush2.bf16.xpose.msra.mxu0 0
        %1237 = vmatprep.subr.bf16.mxu0 0
        %1238 = vmatpush2.bf16.xpose.msra.mxu0 0
        %1239 = vmatprep.subr.bf16.mxu0 0
        %1240 = vmatpush2.bf16.xpose.msra.mxu0 0
        %1241 = vmatprep.subr.bf16.mxu0 0
        %1242 = vmatpush2.bf16.xpose.msra.mxu0 0
        %1243 = vmatprep.subr.bf16.mxu0 0
        %1244 = vmatpush2.bf16.xpose.msra.mxu0 0
        %1245 = vmatprep.subr.bf16.mxu0 0
        %1246 = vmatpush2.bf16.xpose.msra.mxu0 0
        %1247 = vmatprep.subr.bf16.mxu0 0
        %1248 = vmatpush2.bf16.xpose.msra.mxu0 0
        %1249 = vmatprep.subr.bf16.mxu0 0
        %1250 = vmatpush2.bf16.xpose.msra.mxu0 0
        %1251 = vmatprep.mubr.bf16.mxu0 0
        %1252 = vmatmul.mubr.bf16.gmra.mxu0 %v1214
        %v1253 = vpop.f32.mrf.mxu0
        %v1254 = vadd.f32 0.0, %v1253
        %v1255 = vpop.f32.mrf.mxu0
        %v1256 = vpop.f32.mrf.mxu0
        %v1257 = vpop.f32.mrf.mxu0
        %1258 = vdwg.mxu0
        %v1259 = vsel %vm633, %v1254, -inf
        %1260 = vmax.xlane.f32.xlu0 %v1259
        %v1261 = vpop.xlane.xlu0 %1260
        %v1262 = vsub.f32 %v1254, %v1261
        %v1263 = vmul.f32 %v1262, 1.442695
        %v1264 = vpow.pop %v1263
        %v1265 = vsel %vm633, %v1264, 0.0
        %1266 = vadd.xlane.f32.xlu0 %v1265
        %v1267 = vpop.xlane.xlu0 %1266
        %v1268 = vrcp.pop %v1267
        %v1269 = vmul.f32 %v1264, %v1268
        %v1270 = vpack.c.bf16 %v1269, %v1269
        %v1272 = vsel %vm633, %v1270, 0
        %1274 = vmatprep.subr.bf16.mxu0 0
        %1275 = vmatpush1.bf16.msra.mxu0 0
        %1276 = vmatprep.subr.bf16.mxu0 0
        %1277 = vmatpush1.bf16.msra.mxu0 0
        %1278 = vmatprep.subr.bf16.mxu0 0
        %1279 = vmatpush1.bf16.msra.mxu0 0
        %1280 = vmatprep.subr.bf16.mxu0 0
        %1281 = vmatpush1.bf16.msra.mxu0 0
        %1282 = vmatprep.subr.bf16.mxu0 0
        %1283 = vmatpush1.bf16.msra.mxu0 0
        %1284 = vmatprep.subr.bf16.mxu0 0
        %1285 = vmatpush1.bf16.msra.mxu0 0
        %1286 = vmatprep.subr.bf16.mxu0 0
        %1287 = vmatpush1.bf16.msra.mxu0 0
        %1288 = vmatprep.subr.bf16.mxu0 0
        %1289 = vmatpush1.bf16.msra.mxu0 %v585
        %1290 = vmatprep.subr.bf16.mxu0 0
        %1291 = vmatpush2.bf16.msra.mxu0 0
        %1292 = vmatprep.subr.bf16.mxu0 0
        %1293 = vmatpush2.bf16.msra.mxu0 0
        %1294 = vmatprep.subr.bf16.mxu0 0
        %1295 = vmatpush2.bf16.msra.mxu0 0
        %1296 = vmatprep.subr.bf16.mxu0 0
        %1297 = vmatpush2.bf16.msra.mxu0 0
        %1298 = vmatprep.subr.bf16.mxu0 0
        %1299 = vmatpush2.bf16.msra.mxu0 0
        %1300 = vmatprep.subr.bf16.mxu0 0
        %1301 = vmatpush2.bf16.msra.mxu0 0
        %1302 = vmatprep.subr.bf16.mxu0 0
        %1303 = vmatpush2.bf16.msra.mxu0 0
        %1304 = vmatprep.subr.bf16.mxu0 0
        %1305 = vmatpush2.bf16.msra.mxu0 0
        %1306 = vmatprep.mubr.bf16.mxu0 0
        %1307 = vmatmul.mubr.bf16.gmra.mxu0 %v1272
        %v1308 = vpop.f32.mrf.mxu0
        %v1309 = vadd.f32 0.0, %v1308
        %v1310 = vpop.f32.mrf.mxu0
        %v1311 = vpop.f32.mrf.mxu0
        %v1312 = vpop.f32.mrf.mxu0
        %1313 = vdwg.mxu0
        %v1314 = vpack.c.bf16 %v1309, %v1309
        %v1315 = vld [vmem:[#allocation11] sm:$0xf]
        %1316 = vrot.lane.b32.xlu0 %v1212, 120
        %v1317 = vpop.permute.xlu0 %1316
        %1319 = vrot.lane.b32.xlu0 %v518, 120
        %v1320 = vpop.permute.xlu0 %1319
        %v1322 = vsel %vm586, %v1317, 0
        %v1325 = vsel %vm586, %v1320, 0
        %1327 = vmatprep.subr.bf16.mxu0 0
        %1328 = vmatpush1.bf16.xpose.msra.mxu0 0
        %1329 = vmatprep.subr.bf16.mxu0 0
        %1330 = vmatpush1.bf16.xpose.msra.mxu0 0
        %1331 = vmatprep.subr.bf16.mxu0 0
        %1332 = vmatpush1.bf16.xpose.msra.mxu0 0
        %1333 = vmatprep.subr.bf16.mxu0 0
        %1334 = vmatpush1.bf16.xpose.msra.mxu0 0
        %1335 = vmatprep.subr.bf16.mxu0 0
        %1336 = vmatpush1.bf16.xpose.msra.mxu0 0
        %1337 = vmatprep.subr.bf16.mxu0 0
        %1338 = vmatpush1.bf16.xpose.msra.mxu0 0
        %1339 = vmatprep.subr.bf16.mxu0 0
        %1340 = vmatpush1.bf16.xpose.msra.mxu0 0
        %1341 = vmatprep.subr.bf16.mxu0 0
        %1342 = vmatpush1.bf16.xpose.msra.mxu0 %v1325
        %1343 = vmatprep.subr.bf16.mxu0 0
        %1344 = vmatpush2.bf16.xpose.msra.mxu0 0
        %1345 = vmatprep.subr.bf16.mxu0 0
        %1346 = vmatpush2.bf16.xpose.msra.mxu0 0
        %1347 = vmatprep.subr.bf16.mxu0 0
        %1348 = vmatpush2.bf16.xpose.msra.mxu0 0
        %1349 = vmatprep.subr.bf16.mxu0 0
        %1350 = vmatpush2.bf16.xpose.msra.mxu0 0
        %1351 = vmatprep.subr.bf16.mxu0 0
        %1352 = vmatpush2.bf16.xpose.msra.mxu0 0
        %1353 = vmatprep.subr.bf16.mxu0 0
        %1354 = vmatpush2.bf16.xpose.msra.mxu0 0
        %1355 = vmatprep.subr.bf16.mxu0 0
        %1356 = vmatpush2.bf16.xpose.msra.mxu0 0
        %1357 = vmatprep.subr.bf16.mxu0 0
        %1358 = vmatpush2.bf16.xpose.msra.mxu0 0
        %1359 = vmatprep.mubr.bf16.mxu0 0
        %1360 = vmatmul.mubr.bf16.gmra.mxu0 %v1322
        %v1361 = vpop.f32.mrf.mxu0
        %v1362 = vadd.f32 0.0, %v1361
        %v1363 = vpop.f32.mrf.mxu0
        %v1364 = vpop.f32.mrf.mxu0
        %v1365 = vpop.f32.mrf.mxu0
        %1366 = vdwg.mxu0
        %v1367 = vsel %vm633, %v1362, -inf
        %1368 = vmax.xlane.f32.xlu0 %v1367
        %v1369 = vpop.xlane.xlu0 %1368
        %v1370 = vsub.f32 %v1362, %v1369
        %v1371 = vmul.f32 %v1370, 1.442695
        %v1372 = vpow.pop %v1371
        %v1373 = vsel %vm633, %v1372, 0.0
        %1374 = vadd.xlane.f32.xlu0 %v1373
        %v1375 = vpop.xlane.xlu0 %1374
        %v1376 = vrcp.pop %v1375
        %v1377 = vmul.f32 %v1372, %v1376
        %v1378 = vpack.c.bf16 %v1377, %v1377
        %1380 = vrot.lane.b32.xlu0 %v585, 120
        %v1381 = vpop.permute.xlu0 %1380
        %v1384 = vsel %vm633, %v1378, 0
        %1386 = vmatprep.subr.bf16.mxu0 0
        %1387 = vmatpush1.bf16.msra.mxu0 0
        %1388 = vmatprep.subr.bf16.mxu0 0
        %1389 = vmatpush1.bf16.msra.mxu0 0
        %1390 = vmatprep.subr.bf16.mxu0 0
        %1391 = vmatpush1.bf16.msra.mxu0 0
        %1392 = vmatprep.subr.bf16.mxu0 0
        %1393 = vmatpush1.bf16.msra.mxu0 0
        %1394 = vmatprep.subr.bf16.mxu0 0
        %1395 = vmatpush1.bf16.msra.mxu0 0
        %1396 = vmatprep.subr.bf16.mxu0 0
        %1397 = vmatpush1.bf16.msra.mxu0 0
        %1398 = vmatprep.subr.bf16.mxu0 0
        %1399 = vmatpush1.bf16.msra.mxu0 0
        %1400 = vmatprep.subr.bf16.mxu0 0
        %1401 = vmatpush1.bf16.msra.mxu0 %v1381
        %1402 = vmatprep.subr.bf16.mxu0 0
        %1403 = vmatpush2.bf16.msra.mxu0 0
        %1404 = vmatprep.subr.bf16.mxu0 0
        %1405 = vmatpush2.bf16.msra.mxu0 0
        %1406 = vmatprep.subr.bf16.mxu0 0
        %1407 = vmatpush2.bf16.msra.mxu0 0
        %1408 = vmatprep.subr.bf16.mxu0 0
        %1409 = vmatpush2.bf16.msra.mxu0 0
        %1410 = vmatprep.subr.bf16.mxu0 0
        %1411 = vmatpush2.bf16.msra.mxu0 0
        %1412 = vmatprep.subr.bf16.mxu0 0
        %1413 = vmatpush2.bf16.msra.mxu0 0
        %1414 = vmatprep.subr.bf16.mxu0 0
        %1415 = vmatpush2.bf16.msra.mxu0 0
        %1416 = vmatprep.subr.bf16.mxu0 0
        %1417 = vmatpush2.bf16.msra.mxu0 0
        %1418 = vmatprep.mubr.bf16.mxu0 0
        %1419 = vmatmul.mubr.bf16.gmra.mxu0 %v1384
        %v1420 = vpop.f32.mrf.mxu0
        %v1421 = vadd.f32 0.0, %v1420
        %v1422 = vpop.f32.mrf.mxu0
        %v1423 = vpop.f32.mrf.mxu0
        %v1424 = vpop.f32.mrf.mxu0
        %1425 = vdwg.mxu0
        %v1426 = vpack.c.bf16 %v1421, %v1421
        %v1427 = vld [vmem:[#allocation11 + $0x4] sm:$0xf]
        %v1429 = vsel %vm586, %v1426, 0
        %v1432 = vsel %vm807, %v1427, 0
        %1434 = vmatprep.subr.bf16.mxu0 0
        %1435 = vmatpush1.bf16.msra.mxu0 0
        %1436 = vmatprep.subr.bf16.mxu0 0
        %1437 = vmatpush1.bf16.msra.mxu0 0
        %1438 = vmatprep.subr.bf16.mxu0 0
        %1439 = vmatpush1.bf16.msra.mxu0 0
        %1440 = vmatprep.subr.bf16.mxu0 0
        %1441 = vmatpush1.bf16.msra.mxu0 0
        %1442 = vmatprep.subr.bf16.mxu0 0
        %1443 = vmatpush1.bf16.msra.mxu0 0
        %1444 = vmatprep.subr.bf16.mxu0 0
        %1445 = vmatpush1.bf16.msra.mxu0 0
        %1446 = vmatprep.subr.bf16.mxu0 0
        %1447 = vmatpush1.bf16.msra.mxu0 0
        %1448 = vmatprep.subr.bf16.mxu0 0
        %1449 = vmatpush1.bf16.msra.mxu0 %v1432
        %1450 = vmatprep.subr.bf16.mxu0 0
        %1451 = vmatpush2.bf16.msra.mxu0 0
        %1452 = vmatprep.subr.bf16.mxu0 0
        %1453 = vmatpush2.bf16.msra.mxu0 0
        %1454 = vmatprep.subr.bf16.mxu0 0
        %1455 = vmatpush2.bf16.msra.mxu0 0
        %1456 = vmatprep.subr.bf16.mxu0 0
        %1457 = vmatpush2.bf16.msra.mxu0 0
        %1458 = vmatprep.subr.bf16.mxu0 0
        %1459 = vmatpush2.bf16.msra.mxu0 0
        %1460 = vmatprep.subr.bf16.mxu0 0
        %1461 = vmatpush2.bf16.msra.mxu0 0
        %1462 = vmatprep.subr.bf16.mxu0 0
        %1463 = vmatpush2.bf16.msra.mxu0 0
        %1464 = vmatprep.subr.bf16.mxu0 0
        %1465 = vmatpush2.bf16.msra.mxu0 0
        %1466 = vmatprep.mubr.bf16.mxu0 0
        %1467 = vmatmul.mubr.bf16.gmra.mxu0 %v1429
        %v1468 = vpop.f32.mrf.mxu0
        %v1469 = vadd.f32 0.0, %v1468
        %v1470 = vpop.f32.mrf.mxu0
        %v1471 = vpop.f32.mrf.mxu0
        %v1472 = vpop.f32.mrf.mxu0
        %1473 = vdwg.mxu0
        %v1475 = vsel %vm586, %v1314, 0
        %v1478 = vsel %vm807, %v1315, 0
        %1480 = vmatprep.subr.bf16.mxu0 0
        %1481 = vmatpush1.bf16.msra.mxu0 0
        %1482 = vmatprep.subr.bf16.mxu0 0
        %1483 = vmatpush1.bf16.msra.mxu0 0
        %1484 = vmatprep.subr.bf16.mxu0 0
        %1485 = vmatpush1.bf16.msra.mxu0 0
        %1486 = vmatprep.subr.bf16.mxu0 0
        %1487 = vmatpush1.bf16.msra.mxu0 0
        %1488 = vmatprep.subr.bf16.mxu0 0
        %1489 = vmatpush1.bf16.msra.mxu0 0
        %1490 = vmatprep.subr.bf16.mxu0 0
        %1491 = vmatpush1.bf16.msra.mxu0 0
        %1492 = vmatprep.subr.bf16.mxu0 0
        %1493 = vmatpush1.bf16.msra.mxu0 0
        %1494 = vmatprep.subr.bf16.mxu0 0
        %1495 = vmatpush1.bf16.msra.mxu0 %v1478
        %1496 = vmatprep.subr.bf16.mxu0 0
        %1497 = vmatpush2.bf16.msra.mxu0 0
        %1498 = vmatprep.subr.bf16.mxu0 0
        %1499 = vmatpush2.bf16.msra.mxu0 0
        %1500 = vmatprep.subr.bf16.mxu0 0
        %1501 = vmatpush2.bf16.msra.mxu0 0
        %1502 = vmatprep.subr.bf16.mxu0 0
        %1503 = vmatpush2.bf16.msra.mxu0 0
        %1504 = vmatprep.subr.bf16.mxu0 0
        %1505 = vmatpush2.bf16.msra.mxu0 0
        %1506 = vmatprep.subr.bf16.mxu0 0
        %1507 = vmatpush2.bf16.msra.mxu0 0
        %1508 = vmatprep.subr.bf16.mxu0 0
        %1509 = vmatpush2.bf16.msra.mxu0 0
        %1510 = vmatprep.subr.bf16.mxu0 0
        %1511 = vmatpush2.bf16.msra.mxu0 0
        %1512 = vmatprep.mubr.bf16.mxu0 0
        %1513 = vmatmul.mubr.bf16.gmra.mxu0 %v1475
        %v1514 = vpop.f32.mrf.mxu0
        %v1515 = vadd.f32 %v1469, %v1514
        %v1516 = vpop.f32.mrf.mxu0
        %v1517 = vpop.f32.mrf.mxu0
        %v1518 = vpop.f32.mrf.mxu0
        %1519 = vdwg.mxu0
        %1520 = vrot.lane.b32.xlu0 %v1212, 112
        %v1521 = vpop.permute.xlu0 %1520
        %1522 = vrot.lane.b32.xlu0 %v518, 112
        %v1523 = vpop.permute.xlu0 %1522
        %v1525 = vsel %vm586, %v1521, 0
        %v1528 = vsel %vm586, %v1523, 0
        %1530 = vmatprep.subr.bf16.mxu0 0
        %1531 = vmatpush1.bf16.xpose.msra.mxu0 0
        %1532 = vmatprep.subr.bf16.mxu0 0
        %1533 = vmatpush1.bf16.xpose.msra.mxu0 0
        %1534 = vmatprep.subr.bf16.mxu0 0
        %1535 = vmatpush1.bf16.xpose.msra.mxu0 0
        %1536 = vmatprep.subr.bf16.mxu0 0
        %1537 = vmatpush1.bf16.xpose.msra.mxu0 0
        %1538 = vmatprep.subr.bf16.mxu0 0
        %1539 = vmatpush1.bf16.xpose.msra.mxu0 0
        %1540 = vmatprep.subr.bf16.mxu0 0
        %1541 = vmatpush1.bf16.xpose.msra.mxu0 0
        %1542 = vmatprep.subr.bf16.mxu0 0
        %1543 = vmatpush1.bf16.xpose.msra.mxu0 0
        %1544 = vmatprep.subr.bf16.mxu0 0
        %1545 = vmatpush1.bf16.xpose.msra.mxu0 %v1528
        %1546 = vmatprep.subr.bf16.mxu0 0
        %1547 = vmatpush2.bf16.xpose.msra.mxu0 0
        %1548 = vmatprep.subr.bf16.mxu0 0
        %1549 = vmatpush2.bf16.xpose.msra.mxu0 0
        %1550 = vmatprep.subr.bf16.mxu0 0
        %1551 = vmatpush2.bf16.xpose.msra.mxu0 0
        %1552 = vmatprep.subr.bf16.mxu0 0
        %1553 = vmatpush2.bf16.xpose.msra.mxu0 0
        %1554 = vmatprep.subr.bf16.mxu0 0
        %1555 = vmatpush2.bf16.xpose.msra.mxu0 0
        %1556 = vmatprep.subr.bf16.mxu0 0
        %1557 = vmatpush2.bf16.xpose.msra.mxu0 0
        %1558 = vmatprep.subr.bf16.mxu0 0
        %1559 = vmatpush2.bf16.xpose.msra.mxu0 0
        %1560 = vmatprep.subr.bf16.mxu0 0
        %1561 = vmatpush2.bf16.xpose.msra.mxu0 0
        %1562 = vmatprep.mubr.bf16.mxu0 0
        %1563 = vmatmul.mubr.bf16.gmra.mxu0 %v1525
        %v1564 = vpop.f32.mrf.mxu0
        %v1565 = vadd.f32 0.0, %v1564
        %v1566 = vpop.f32.mrf.mxu0
        %v1567 = vpop.f32.mrf.mxu0
        %v1568 = vpop.f32.mrf.mxu0
        %1569 = vdwg.mxu0
        %v1570 = vsel %vm633, %v1565, -inf
        %1571 = vmax.xlane.f32.xlu0 %v1570
        %v1572 = vpop.xlane.xlu0 %1571
        %v1573 = vsub.f32 %v1565, %v1572
        %v1574 = vmul.f32 %v1573, 1.442695
        %v1575 = vpow.pop %v1574
        %v1576 = vsel %vm633, %v1575, 0.0
        %1577 = vadd.xlane.f32.xlu0 %v1576
        %v1578 = vpop.xlane.xlu0 %1577
        %v1579 = vrcp.pop %v1578
        %v1580 = vmul.f32 %v1575, %v1579
        %v1581 = vpack.c.bf16 %v1580, %v1580
        %1582 = vrot.lane.b32.xlu0 %v585, 112
        %v1583 = vpop.permute.xlu0 %1582
        %v1586 = vsel %vm633, %v1581, 0
        %1588 = vmatprep.subr.bf16.mxu0 0
        %1589 = vmatpush1.bf16.msra.mxu0 0
        %1590 = vmatprep.subr.bf16.mxu0 0
        %1591 = vmatpush1.bf16.msra.mxu0 0
        %1592 = vmatprep.subr.bf16.mxu0 0
        %1593 = vmatpush1.bf16.msra.mxu0 0
        %1594 = vmatprep.subr.bf16.mxu0 0
        %1595 = vmatpush1.bf16.msra.mxu0 0
        %1596 = vmatprep.subr.bf16.mxu0 0
        %1597 = vmatpush1.bf16.msra.mxu0 0
        %1598 = vmatprep.subr.bf16.mxu0 0
        %1599 = vmatpush1.bf16.msra.mxu0 0
        %1600 = vmatprep.subr.bf16.mxu0 0
        %1601 = vmatpush1.bf16.msra.mxu0 0
        %1602 = vmatprep.subr.bf16.mxu0 0
        %1603 = vmatpush1.bf16.msra.mxu0 %v1583
        %1604 = vmatprep.subr.bf16.mxu0 0
        %1605 = vmatpush2.bf16.msra.mxu0 0
        %1606 = vmatprep.subr.bf16.mxu0 0
        %1607 = vmatpush2.bf16.msra.mxu0 0
        %1608 = vmatprep.subr.bf16.mxu0 0
        %1609 = vmatpush2.bf16.msra.mxu0 0
        %1610 = vmatprep.subr.bf16.mxu0 0
        %1611 = vmatpush2.bf16.msra.mxu0 0
        %1612 = vmatprep.subr.bf16.mxu0 0
        %1613 = vmatpush2.bf16.msra.mxu0 0
        %1614 = vmatprep.subr.bf16.mxu0 0
        %1615 = vmatpush2.bf16.msra.mxu0 0
        %1616 = vmatprep.subr.bf16.mxu0 0
        %1617 = vmatpush2.bf16.msra.mxu0 0
        %1618 = vmatprep.subr.bf16.mxu0 0
        %1619 = vmatpush2.bf16.msra.mxu0 0
        %1620 = vmatprep.mubr.bf16.mxu0 0
        %1621 = vmatmul.mubr.bf16.gmra.mxu0 %v1586
        %v1622 = vpop.f32.mrf.mxu0
        %v1623 = vadd.f32 0.0, %v1622
        %v1624 = vpop.f32.mrf.mxu0
        %v1625 = vpop.f32.mrf.mxu0
        %v1626 = vpop.f32.mrf.mxu0
        %1627 = vdwg.mxu0
        %v1628 = vpack.c.bf16 %v1623, %v1623
        %v1629 = vld [vmem:[#allocation11 + $0x8] sm:$0xf]
        %v1631 = vsel %vm586, %v1628, 0
        %v1634 = vsel %vm807, %v1629, 0
        %1636 = vmatprep.subr.bf16.mxu0 0
        %1637 = vmatpush1.bf16.msra.mxu0 0
        %1638 = vmatprep.subr.bf16.mxu0 0
        %1639 = vmatpush1.bf16.msra.mxu0 0
        %1640 = vmatprep.subr.bf16.mxu0 0
        %1641 = vmatpush1.bf16.msra.mxu0 0
        %1642 = vmatprep.subr.bf16.mxu0 0
        %1643 = vmatpush1.bf16.msra.mxu0 0
        %1644 = vmatprep.subr.bf16.mxu0 0
        %1645 = vmatpush1.bf16.msra.mxu0 0
        %1646 = vmatprep.subr.bf16.mxu0 0
        %1647 = vmatpush1.bf16.msra.mxu0 0
        %1648 = vmatprep.subr.bf16.mxu0 0
        %1649 = vmatpush1.bf16.msra.mxu0 0
        %1650 = vmatprep.subr.bf16.mxu0 0
        %1651 = vmatpush1.bf16.msra.mxu0 %v1634
        %1652 = vmatprep.subr.bf16.mxu0 0
        %1653 = vmatpush2.bf16.msra.mxu0 0
        %1654 = vmatprep.subr.bf16.mxu0 0
        %1655 = vmatpush2.bf16.msra.mxu0 0
        %1656 = vmatprep.subr.bf16.mxu0 0
        %1657 = vmatpush2.bf16.msra.mxu0 0
        %1658 = vmatprep.subr.bf16.mxu0 0
        %1659 = vmatpush2.bf16.msra.mxu0 0
        %1660 = vmatprep.subr.bf16.mxu0 0
        %1661 = vmatpush2.bf16.msra.mxu0 0
        %1662 = vmatprep.subr.bf16.mxu0 0
        %1663 = vmatpush2.bf16.msra.mxu0 0
        %1664 = vmatprep.subr.bf16.mxu0 0
        %1665 = vmatpush2.bf16.msra.mxu0 0
        %1666 = vmatprep.subr.bf16.mxu0 0
        %1667 = vmatpush2.bf16.msra.mxu0 0
        %1668 = vmatprep.mubr.bf16.mxu0 0
        %1669 = vmatmul.mubr.bf16.gmra.mxu0 %v1631
        %v1670 = vpop.f32.mrf.mxu0
        %v1671 = vadd.f32 0.0, %v1670
        %v1672 = vpop.f32.mrf.mxu0
        %v1673 = vpop.f32.mrf.mxu0
        %v1674 = vpop.f32.mrf.mxu0
        %1675 = vdwg.mxu0
        %v1676 = vadd.f32 %v1515, %v1671
        %1677 = vrot.lane.b32.xlu0 %v1212, 104
        %v1678 = vpop.permute.xlu0 %1677
        %1679 = vrot.lane.b32.xlu0 %v518, 104
        %v1680 = vpop.permute.xlu0 %1679
        %v1682 = vsel %vm586, %v1678, 0
        %v1685 = vsel %vm586, %v1680, 0
        %1687 = vmatprep.subr.bf16.mxu0 0
        %1688 = vmatpush1.bf16.xpose.msra.mxu0 0
        %1689 = vmatprep.subr.bf16.mxu0 0
        %1690 = vmatpush1.bf16.xpose.msra.mxu0 0
        %1691 = vmatprep.subr.bf16.mxu0 0
        %1692 = vmatpush1.bf16.xpose.msra.mxu0 0
        %1693 = vmatprep.subr.bf16.mxu0 0
        %1694 = vmatpush1.bf16.xpose.msra.mxu0 0
        %1695 = vmatprep.subr.bf16.mxu0 0
        %1696 = vmatpush1.bf16.xpose.msra.mxu0 0
        %1697 = vmatprep.subr.bf16.mxu0 0
        %1698 = vmatpush1.bf16.xpose.msra.mxu0 0
        %1699 = vmatprep.subr.bf16.mxu0 0
        %1700 = vmatpush1.bf16.xpose.msra.mxu0 0
        %1701 = vmatprep.subr.bf16.mxu0 0
        %1702 = vmatpush1.bf16.xpose.msra.mxu0 %v1685
        %1703 = vmatprep.subr.bf16.mxu0 0
        %1704 = vmatpush2.bf16.xpose.msra.mxu0 0
        %1705 = vmatprep.subr.bf16.mxu0 0
        %1706 = vmatpush2.bf16.xpose.msra.mxu0 0
        %1707 = vmatprep.subr.bf16.mxu0 0
        %1708 = vmatpush2.bf16.xpose.msra.mxu0 0
        %1709 = vmatprep.subr.bf16.mxu0 0
        %1710 = vmatpush2.bf16.xpose.msra.mxu0 0
        %1711 = vmatprep.subr.bf16.mxu0 0
        %1712 = vmatpush2.bf16.xpose.msra.mxu0 0
        %1713 = vmatprep.subr.bf16.mxu0 0
        %1714 = vmatpush2.bf16.xpose.msra.mxu0 0
        %1715 = vmatprep.subr.bf16.mxu0 0
        %1716 = vmatpush2.bf16.xpose.msra.mxu0 0
        %1717 = vmatprep.subr.bf16.mxu0 0
        %1718 = vmatpush2.bf16.xpose.msra.mxu0 0
        %1719 = vmatprep.mubr.bf16.mxu0 0
        %1720 = vmatmul.mubr.bf16.gmra.mxu0 %v1682
        %v1721 = vpop.f32.mrf.mxu0
        %v1722 = vadd.f32 0.0, %v1721
        %v1723 = vpop.f32.mrf.mxu0
        %v1724 = vpop.f32.mrf.mxu0
        %v1725 = vpop.f32.mrf.mxu0
        %1726 = vdwg.mxu0
        %v1727 = vsel %vm633, %v1722, -inf
        %1728 = vmax.xlane.f32.xlu0 %v1727
        %v1729 = vpop.xlane.xlu0 %1728
        %v1730 = vsub.f32 %v1722, %v1729
        %v1731 = vmul.f32 %v1730, 1.442695
        %v1732 = vpow.pop %v1731
        %v1733 = vsel %vm633, %v1732, 0.0
        %1734 = vadd.xlane.f32.xlu0 %v1733
        %v1735 = vpop.xlane.xlu0 %1734
        %v1736 = vrcp.pop %v1735
        %v1737 = vmul.f32 %v1732, %v1736
        %v1738 = vpack.c.bf16 %v1737, %v1737
        %1739 = vrot.lane.b32.xlu0 %v585, 104
        %v1740 = vpop.permute.xlu0 %1739
        %v1743 = vsel %vm633, %v1738, 0
        %1745 = vmatprep.subr.bf16.mxu0 0
        %1746 = vmatpush1.bf16.msra.mxu0 0
        %1747 = vmatprep.subr.bf16.mxu0 0
        %1748 = vmatpush1.bf16.msra.mxu0 0
        %1749 = vmatprep.subr.bf16.mxu0 0
        %1750 = vmatpush1.bf16.msra.mxu0 0
        %1751 = vmatprep.subr.bf16.mxu0 0
        %1752 = vmatpush1.bf16.msra.mxu0 0
        %1753 = vmatprep.subr.bf16.mxu0 0
        %1754 = vmatpush1.bf16.msra.mxu0 0
        %1755 = vmatprep.subr.bf16.mxu0 0
        %1756 = vmatpush1.bf16.msra.mxu0 0
        %1757 = vmatprep.subr.bf16.mxu0 0
        %1758 = vmatpush1.bf16.msra.mxu0 0
        %1759 = vmatprep.subr.bf16.mxu0 0
        %1760 = vmatpush1.bf16.msra.mxu0 %v1740
        %1761 = vmatprep.subr.bf16.mxu0 0
        %1762 = vmatpush2.bf16.msra.mxu0 0
        %1763 = vmatprep.subr.bf16.mxu0 0
        %1764 = vmatpush2.bf16.msra.mxu0 0
        %1765 = vmatprep.subr.bf16.mxu0 0
        %1766 = vmatpush2.bf16.msra.mxu0 0
        %1767 = vmatprep.subr.bf16.mxu0 0
        %1768 = vmatpush2.bf16.msra.mxu0 0
        %1769 = vmatprep.subr.bf16.mxu0 0
        %1770 = vmatpush2.bf16.msra.mxu0 0
        %1771 = vmatprep.subr.bf16.mxu0 0
        %1772 = vmatpush2.bf16.msra.mxu0 0
        %1773 = vmatprep.subr.bf16.mxu0 0
        %1774 = vmatpush2.bf16.msra.mxu0 0
        %1775 = vmatprep.subr.bf16.mxu0 0
        %1776 = vmatpush2.bf16.msra.mxu0 0
        %1777 = vmatprep.mubr.bf16.mxu0 0
        %1778 = vmatmul.mubr.bf16.gmra.mxu0 %v1743
        %v1779 = vpop.f32.mrf.mxu0
        %v1780 = vadd.f32 0.0, %v1779
        %v1781 = vpop.f32.mrf.mxu0
        %v1782 = vpop.f32.mrf.mxu0
        %v1783 = vpop.f32.mrf.mxu0
        %1784 = vdwg.mxu0
        %v1785 = vpack.c.bf16 %v1780, %v1780
        %v1786 = vld [vmem:[#allocation11 + $0xc] sm:$0xf]
        %v1788 = vsel %vm586, %v1785, 0
        %v1791 = vsel %vm807, %v1786, 0
        %1793 = vmatprep.subr.bf16.mxu0 0
        %1794 = vmatpush1.bf16.msra.mxu0 0
        %1795 = vmatprep.subr.bf16.mxu0 0
        %1796 = vmatpush1.bf16.msra.mxu0 0
        %1797 = vmatprep.subr.bf16.mxu0 0
        %1798 = vmatpush1.bf16.msra.mxu0 0
        %1799 = vmatprep.subr.bf16.mxu0 0
        %1800 = vmatpush1.bf16.msra.mxu0 0
        %1801 = vmatprep.subr.bf16.mxu0 0
        %1802 = vmatpush1.bf16.msra.mxu0 0
        %1803 = vmatprep.subr.bf16.mxu0 0
        %1804 = vmatpush1.bf16.msra.mxu0 0
        %1805 = vmatprep.subr.bf16.mxu0 0
        %1806 = vmatpush1.bf16.msra.mxu0 0
        %1807 = vmatprep.subr.bf16.mxu0 0
        %1808 = vmatpush1.bf16.msra.mxu0 %v1791
        %1809 = vmatprep.subr.bf16.mxu0 0
        %1810 = vmatpush2.bf16.msra.mxu0 0
        %1811 = vmatprep.subr.bf16.mxu0 0
        %1812 = vmatpush2.bf16.msra.mxu0 0
        %1813 = vmatprep.subr.bf16.mxu0 0
        %1814 = vmatpush2.bf16.msra.mxu0 0
        %1815 = vmatprep.subr.bf16.mxu0 0
        %1816 = vmatpush2.bf16.msra.mxu0 0
        %1817 = vmatprep.subr.bf16.mxu0 0
        %1818 = vmatpush2.bf16.msra.mxu0 0
        %1819 = vmatprep.subr.bf16.mxu0 0
        %1820 = vmatpush2.bf16.msra.mxu0 0
        %1821 = vmatprep.subr.bf16.mxu0 0
        %1822 = vmatpush2.bf16.msra.mxu0 0
        %1823 = vmatprep.subr.bf16.mxu0 0
        %1824 = vmatpush2.bf16.msra.mxu0 0
        %1825 = vmatprep.mubr.bf16.mxu0 0
        %1826 = vmatmul.mubr.bf16.gmra.mxu0 %v1788
        %v1827 = vpop.f32.mrf.mxu0
        %v1828 = vadd.f32 0.0, %v1827
        %v1829 = vpop.f32.mrf.mxu0
        %v1830 = vpop.f32.mrf.mxu0
        %v1831 = vpop.f32.mrf.mxu0
        %1832 = vdwg.mxu0
        %v1833 = vadd.f32 %v1676, %v1828
        %s1834 = scalar_lea.vmem %s368, 8 [#allocation13]
        %1835 = vst.msk [vmem:[%s1834] sm:$0xff] %vm398, %v1833
        %s1836 = sand.u32 %s172, 1
        %s1837 = scalar_lea.sflag [#allocation4], %s1836
        %s1838 = sand.u32 %s172, 1
        %s1839 = smul.addr %s1838, 16
        %s1840 = scalar_lea.vmem [#allocation13], %s1839
        // Predicated region
        $region69: #{tpu_custom_call.1} parent=43 // pred_check
          %p1841 = pneg %p182
        $region70: #{tpu_custom_call.1} parent=43 // pred_check_branch
          %1843 = sbr.rel (%p1841) target = $region72
        $region71: #{tpu_custom_call.1} parent=43 // pred_region
          %s1844 = smul.u32 2, %s28
          %s1846 = ssub.s32 256, 256
          %1847 = vsyncadd %s1837, %s1846
          %s1848 = smul.addr %s1844, 128
          %s1849 = scalar_lea.hbm %s6, %s1848
          %s1850 = sshll.u32 %s1840, 4
          %s1851 = int_to_ptr.vmem [resolvable:$true] %s1850
          %1856 = dma.vmem_to_hbm [thread:$0]  %s1851, 256, %s1849, %s1837, 128, 128, 8
        $region72: #{tpu_custom_call.1} parent=43 // pred_fallthru
          _
      $region44: #{tpu_custom_call.1} parent=5 // pred_fallthru
        _
      %p1857 = scmp.le.s32.totalorder 2, %s23
      // Predicated region
      $region73: #{tpu_custom_call.1} parent=5 // pred_check
        %p1858 = pneg %p1857
      $region74: #{tpu_custom_call.1} parent=5 // pred_check_branch
        %1860 = sbr.rel (%p1858) target = $region76
      $region75: #{tpu_custom_call.1} parent=5 // pred_region
        %s1861 = ssub.s32 %s23, 2
        // Predicated region
        $region77: #{tpu_custom_call.1} parent=75 // pred_check
          %p1862 = pneg %p188
        $region78: #{tpu_custom_call.1} parent=75 // pred_check_branch
          %1864 = sbr.rel (%p1862) target = $region80
        $region79: #{tpu_custom_call.1} parent=75 // pred_region
          %s1865 = sand.u32 %s173, 1
          %s1866 = scalar_lea.sflag [#allocation4], %s1865
          %s1867 = sand.u32 %s173, 1
          %s1868 = smul.addr %s1867, 16
          %s1869 = scalar_lea.vmem [#allocation13], %s1868
          %1870 = dma.done %s1866, 256
        $region80: #{tpu_custom_call.1} parent=75 // pred_fallthru
          _
      $region76: #{tpu_custom_call.1} parent=5 // pred_fallthru
        _
    $region6: #{tpu_custom_call.1} parent=1 // loop_footer
      %s27 = sadd.s32 1, %s23
    $region7: #{tpu_custom_call.1} parent=1 // loop_footer_branch
      %22 = sbr.rel target = $region3
    $region8: #{tpu_custom_call.1} parent=1 // loop_exit
      _
    %1871 = vsyncpa [#allocation3], 1
    %s1872 = scalar_lea.sflag [#allocation3], 1
    %1873 = vsyncpa %s1872, 1
    %1874 = vsyncpa [#allocation6], 1
    %s1875 = scalar_lea.sflag [#allocation6], 1
    %1876 = vsyncpa %s1875, 1
    %1877 = vsyncpa [#allocation9], 1
    %1878 = vsyncpa [#allocation12], 1
    %1879 = vsyncpa [#allocation4], 1
    %s1880 = scalar_lea.sflag [#allocation4], 1
    %1881 = vsyncpa %s1880, 1

</llo_original>
